<compile_context>
chip_gen: v7x
topology: tpu7x:2x2x1
jax: 0.10.0
libtpu: 0.0.40
codegen_flags: <defaults>
</compile_context>

<pallas_src>
import math
import functools

import jax
import jax.numpy as jnp
from jax.experimental import pallas as pl
from jax.experimental.pallas import tpu as pltpu


# ---------------------------------------------------------------------------
# Parameter setup (plain JAX glue): gaussian orthogonal random features,
# mirroring gaussian_orthogonal_random_matrix(scaling=0) from the PyTorch code.
# ---------------------------------------------------------------------------
def gaussian_orthogonal_random_matrix(key, nb_rows, nb_columns, scaling=0):
    nb_full_blocks = nb_rows // nb_columns
    keys = jax.random.split(key, nb_full_blocks + 2)
    block_list = []
    for i in range(nb_full_blocks):
        unstructured = jax.random.normal(keys[i], (nb_columns, nb_columns), jnp.float32)
        q, _ = jnp.linalg.qr(unstructured)
        block_list.append(q.T)
    remaining_rows = nb_rows - nb_full_blocks * nb_columns
    if remaining_rows > 0:
        unstructured = jax.random.normal(
            keys[nb_full_blocks], (nb_columns, nb_columns), jnp.float32
        )
        q, _ = jnp.linalg.qr(unstructured)
        block_list.append(q.T[:remaining_rows])
    final_matrix = jnp.concatenate(block_list, axis=0)
    if scaling == 0:
        multiplier = jnp.linalg.norm(
            jax.random.normal(keys[-1], (nb_rows, nb_columns), jnp.float32), axis=1
        )
    elif scaling == 1:
        multiplier = math.sqrt(float(nb_columns)) * jnp.ones((nb_rows,), jnp.float32)
    else:
        raise ValueError(f"Invalid scaling {scaling}")
    return multiplier[:, None] * final_matrix


# ---------------------------------------------------------------------------
# Literal `Always` module as a Pallas kernel: fill output with a constant.
# ---------------------------------------------------------------------------
def _always_kernel(o_ref, *, val):
    o_ref[...] = jnp.full(o_ref.shape, val, o_ref.dtype)


def always_pallas(val, shape=(8, 128), dtype=jnp.float32):
    return pl.pallas_call(
        functools.partial(_always_kernel, val=float(val)),
        out_shape=jax.ShapeDtypeStruct(shape, dtype),
    )()


# ---------------------------------------------------------------------------
# Pallas kernel: softmax random-feature maps for q / k + non-causal linear
# attention, fused over a group of G (batch*head) slabs per grid step.
# ---------------------------------------------------------------------------
def _fast_attention_kernel(q_ref, k_ref, v_ref, pT_ref, o_ref,
                           *, m_real, dn_sq_half, kernel_eps):
    # q_ref/k_ref : (G, N, D)      one group of heads
    # v_ref       : (G, N, Dv)
    # pT_ref      : (D, Mp)        projection^T, pre-scaled by D**-0.25,
    #                              zero-padded from m_real to Mp (lane-dense)
    # o_ref       : (G, Dv, N)     transposed output (lane-dense in N)
    G, N, D = q_ref.shape
    Mp = pT_ref.shape[1]

    mm_dtype = q_ref.dtype                      # bf16 stays bf16 on the MXU
    q = q_ref[...]                              # (G, N, D), native dtype
    k = k_ref[...]
    v = v_ref[...]
    pT = pT_ref[...].astype(mm_dtype)           # (D, Mp)

    # --- feature-map projection: one lane-dense 2-D matmul for all G heads ---
    q_dash = jnp.dot(q.reshape(G * N, D), pT,
                     preferred_element_type=jnp.float32).reshape(G, N, Mp)
    k_dash = jnp.dot(k.reshape(G * N, D), pT,
                     preferred_element_type=jnp.float32).reshape(G, N, Mp)

    q_f32 = q.astype(jnp.float32)
    k_f32 = k.astype(jnp.float32)
    diag_q = jnp.sum(q_f32 * q_f32, axis=-1, keepdims=True) * dn_sq_half  # (G,N,1)
    diag_k = jnp.sum(k_f32 * k_f32, axis=-1, keepdims=True) * dn_sq_half  # (G,N,1)

    # --- mask the padded feature lanes so they contribute exactly zero ---
    lane = jax.lax.broadcasted_iota(jnp.int32, (1, 1, Mp), 2)
    mask_b = lane < m_real                                  # (1,1,Mp) bool
    mask_f = mask_b.astype(jnp.float32)
    neg_big = jnp.float32(-1e30)
    q_dash = jnp.where(mask_b, q_dash, neg_big)
    k_dash = jnp.where(mask_b, k_dash, neg_big)

    # stabilizers: per-row max for q, per-head global max for k (as reference)
    q_max = jnp.max(q_dash, axis=-1, keepdims=True)                         # (G,N,1)
    k_max = jnp.max(jnp.max(k_dash, axis=2, keepdims=True),
                    axis=1, keepdims=True)                                  # (G,1,1)

    # NOTE: ratio = Mp**-0.5 cancels exactly between numerator & denominator
    # and is dropped.  Padded lanes: exp(-1e30) -> 0, then (+eps) is zeroed by
    # the mask, so results match the un-padded (m_real) computation exactly.
    q_prime = (jnp.exp(q_dash - diag_q - q_max) + kernel_eps) * mask_f      # f32
    k_prime = (jnp.exp(k_dash - diag_k - k_max) + kernel_eps) * mask_f      # f32

    qp = q_prime.astype(mm_dtype)
    kp = k_prime.astype(mm_dtype)

    # --- linear attention ---
    # context[g,m,e] = sum_n k'[g,n,m] v[g,n,e]
    context = jnp.einsum("gnm,gnv->gmv", kp, v,
                         preferred_element_type=jnp.float32)                # (G,Mp,Dv)
    # transposed numerator: out_t[g,e,n] = sum_m context[g,m,e] q'[g,n,m]
    out_t = jnp.einsum("gmv,gnm->gvn", context.astype(mm_dtype), qp,
                       preferred_element_type=jnp.float32)                  # (G,Dv,N)
    # transposed denominator (f32 for precision): denom_t[g,0,n]
    k_cumsum = jnp.sum(k_prime, axis=1, keepdims=True)                      # (G,1,Mp)
    denom_t = jnp.einsum("gum,gnm->gun", k_cumsum, q_prime,
                         preferred_element_type=jnp.float32)                # (G,1,N)

    d_inv = pl.reciprocal(denom_t, approx=True)                             # EUP slot
    o_ref[...] = (out_t * d_inv).astype(o_ref.dtype)


def _pick_group(bh, max_group=8):
    g = 1
    for cand in range(1, min(bh, max_group) + 1):
        if bh % cand == 0:
            g = cand
    return g


def fast_attention_pallas(q, k, v, projection_matrix, *, kernel_eps=1e-4,
                          max_group=8):
    """Performer non-causal attention. q,k,v: (B,H,N,D). Returns (B,H,N,Dv)."""
    B, H, N, D = q.shape
    Dv = v.shape[-1]
    M = projection_matrix.shape[0]
    Mp = ((M + 127) // 128) * 128          # lane-dense padded feature count
    BH = B * H
    G = _pick_group(BH, max_group)

    # Fold data_normalizer into the (pre-transposed, zero-padded) projection.
    dn = float(D) ** -0.25
    proj_scaled = projection_matrix.astype(jnp.float32) * dn       # (M, D)
    projT = jnp.zeros((D, Mp), jnp.float32).at[:, :M].set(proj_scaled.T)

    qf = q.reshape(BH, N, D)
    kf = k.reshape(BH, N, D)
    vf = v.reshape(BH, N, Dv)

    kernel = functools.partial(
        _fast_attention_kernel,
        m_real=M,
        dn_sq_half=0.5 * dn * dn,
        kernel_eps=kernel_eps,
    )

    out_t = pl.pallas_call(
        kernel,
        out_shape=jax.ShapeDtypeStruct((BH, Dv, N), q.dtype),
        grid_spec=pltpu.PrefetchScalarGridSpec(
            num_scalar_prefetch=0,
            grid=(BH // G,),
            in_specs=[
                pl.BlockSpec((G, N, D), lambda i: (i, 0, 0)),
                pl.BlockSpec((G, N, D), lambda i: (i, 0, 0)),
                pl.BlockSpec((G, N, Dv), lambda i: (i, 0, 0)),
                pl.BlockSpec((D, Mp), lambda i: (0, 0)),   # resident (const map)
            ],
            out_specs=pl.BlockSpec((G, Dv, N), lambda i: (i, 0, 0)),
        ),
        compiler_params=pltpu.CompilerParams(
            dimension_semantics=("parallel",),
            vmem_limit_bytes=48 * 1024 * 1024,
        ),
    )(qf, kf, vf, projT)

    # (BH, Dv, N) -> (B, H, N, Dv): layout plumbing outside the kernel.
    return jnp.transpose(out_t, (0, 2, 1)).reshape(B, H, N, Dv)


# ---------------------------------------------------------------------------
# Pure-JAX reference (mirrors softmax_kernel + linear_attention) for checking.
# ---------------------------------------------------------------------------
def _reference(q, k, v, proj, kernel_eps=1e-4):
    d = q.shape[-1]
    m = proj.shape[0]
    dn = float(d) ** -0.25
    ratio = float(m) ** -0.5
    q_dash = jnp.einsum("bhid,jd->bhij", dn * q, proj)
    k_dash = jnp.einsum("bhid,jd->bhij", dn * k, proj)
    diag_q = jnp.sum(q**2, -1, keepdims=True) * 0.5 * dn**2
    diag_k = jnp.sum(k**2, -1, keepdims=True) * 0.5 * dn**2
    qp = ratio * (jnp.exp(q_dash - diag_q - jnp.max(q_dash, -1, keepdims=True)) + kernel_eps)
    kp = ratio * (
        jnp.exp(k_dash - diag_k - jnp.max(k_dash, axis=(-1, -2), keepdims=True)) + kernel_eps
    )
    k_cumsum = kp.sum(-2)
    d_inv = 1.0 / jnp.einsum("bhnd,bhd->bhn", qp, k_cumsum)
    context = jnp.einsum("bhnd,bhne->bhde", kp, v)
    return jnp.einsum("bhde,bhnd,bhn->bhne", context, qp, d_inv)


if __name__ == "__main__":
    key = jax.random.PRNGKey(0)
    k_q, k_k, k_v, k_p = jax.random.split(key, 4)

    B, H, N, D = 2, 2, 8, 16
    nb_features = int(D * math.log(D))  # FastAttention default: 44

    q = jax.random.normal(k_q, (B, H, N, D), jnp.float32)
    k = jax.random.normal(k_k, (B, H, N, D), jnp.float32)
    v = jax.random.normal(k_v, (B, H, N, D), jnp.float32)
    proj = gaussian_orthogonal_random_matrix(k_p, nb_features, D, scaling=0)

    out = fast_attention_pallas(q, k, v, proj)
    out = jax.block_until_ready(out)

    ref = _reference(q, k, v, proj)
    assert out.shape == (B, H, N, D)
    # tolerance loosened slightly for pl.reciprocal(approx=True)
    assert jnp.allclose(out, ref, atol=2e-3, rtol=2e-3), "mismatch vs reference"

    # Literal `Always` module: constant output.
    a = jax.block_until_ready(always_pallas(3.5, shape=(8, 128)))
    assert jnp.allclose(a, 3.5), "Always kernel mismatch"

    print("KERNEL_OK")
</pallas_src>

<mosaic_0001>
module attributes {stable_mosaic.version = 11 : i64} {
  func.func @_fast_attention_kernel(%arg0: i32, %arg1: memref<4x8x16xf32, #tpu.memory_space<vmem>>, %arg2: memref<4x8x16xf32, #tpu.memory_space<vmem>>, %arg3: memref<4x8x16xf32, #tpu.memory_space<vmem>>, %arg4: memref<16x128xf32, #tpu.memory_space<vmem>>, %arg5: memref<4x16x8xf32, #tpu.memory_space<vmem>>) attributes {dimension_semantics = [#tpu.dimension_semantics<parallel>], iteration_bounds = array<i64: 1>, scalar_prefetch = 0 : i64, scratch_operands = 0 : i64, tpu.core_type = #tpu.core_type<tc>, window_params = [{transform_indices = @transform_0, window_bounds = array<i64: 4, 8, 16>}, {transform_indices = @transform_1, window_bounds = array<i64: 4, 8, 16>}, {transform_indices = @transform_2, window_bounds = array<i64: 4, 8, 16>}, {pipeline_mode = #tpu.pipeline_mode<synchronous>, transform_indices = @transform_3, window_bounds = array<i64: 16, 128>}, {transform_indices = @transform_4, window_bounds = array<i64: 4, 16, 8>}]} {
    %c0 = arith.constant 0 : index
    %c0_0 = arith.constant 0 : index
    %c0_1 = arith.constant 0 : index
    %0 = vector.load %arg1[%c0, %c0_0, %c0_1] : memref<4x8x16xf32, #tpu.memory_space<vmem>>, vector<4x8x16xf32>
    %c0_2 = arith.constant 0 : index
    %c0_3 = arith.constant 0 : index
    %c0_4 = arith.constant 0 : index
    %1 = vector.load %arg2[%c0_2, %c0_3, %c0_4] : memref<4x8x16xf32, #tpu.memory_space<vmem>>, vector<4x8x16xf32>
    %c0_5 = arith.constant 0 : index
    %c0_6 = arith.constant 0 : index
    %c0_7 = arith.constant 0 : index
    %2 = vector.load %arg3[%c0_5, %c0_6, %c0_7] : memref<4x8x16xf32, #tpu.memory_space<vmem>>, vector<4x8x16xf32>
    %c0_8 = arith.constant 0 : index
    %c0_9 = arith.constant 0 : index
    %3 = vector.load %arg4[%c0_8, %c0_9] : memref<16x128xf32, #tpu.memory_space<vmem>>, vector<16x128xf32>
    %4 = vector.shape_cast %0 : vector<4x8x16xf32> to vector<32x16xf32>
    %cst = arith.constant dense<0.000000e+00> : vector<32x128xf32>
    %5 = tpu.matmul %4, %3, %cst {dimension_numbers = #tpu.dot_dimension_numbers<[1], [0], [0], [1], [0, 0, 1, 1], [], []>} : vector<32x16xf32>, vector<16x128xf32>, vector<32x128xf32> -> vector<32x128xf32>
    %6 = vector.shape_cast %5 : vector<32x128xf32> to vector<4x8x128xf32>
    %7 = vector.shape_cast %1 : vector<4x8x16xf32> to vector<32x16xf32>
    %cst_10 = arith.constant dense<0.000000e+00> : vector<32x128xf32>
    %8 = tpu.matmul %7, %3, %cst_10 {dimension_numbers = #tpu.dot_dimension_numbers<[1], [0], [0], [1], [0, 0, 1, 1], [], []>} : vector<32x16xf32>, vector<16x128xf32>, vector<32x128xf32> -> vector<32x128xf32>
    %9 = vector.shape_cast %8 : vector<32x128xf32> to vector<4x8x128xf32>
    %10 = arith.mulf %0, %0 : vector<4x8x16xf32>
    %cst_11 = arith.constant dense<0.000000e+00> : vector<4x8xf32>
    %11 = vector.multi_reduction <add>, %10, %cst_11 [2] : vector<4x8x16xf32> to vector<4x8xf32>
    %12 = vector.shape_cast %11 : vector<4x8xf32> to vector<4x8x1xf32>
    %cst_12 = arith.constant 1.250000e-01 : f32
    %13 = vector.broadcast %cst_12 : f32 to vector<4x8x1xf32>
    %14 = arith.mulf %12, %13 : vector<4x8x1xf32>
    %15 = arith.mulf %1, %1 : vector<4x8x16xf32>
    %cst_13 = arith.constant dense<0.000000e+00> : vector<4x8xf32>
    %16 = vector.multi_reduction <add>, %15, %cst_13 [2] : vector<4x8x16xf32> to vector<4x8xf32>
    %17 = vector.shape_cast %16 : vector<4x8xf32> to vector<4x8x1xf32>
    %cst_14 = arith.constant 1.250000e-01 : f32
    %18 = vector.broadcast %cst_14 : f32 to vector<4x8x1xf32>
    %19 = arith.mulf %17, %18 : vector<4x8x1xf32>
    %20 = tpu.iota {dimensions = array<i32: 2>} : vector<1x1x128xi32>
    %c44_i32 = arith.constant 44 : i32
    %21 = vector.broadcast %c44_i32 : i32 to vector<1x1x128xi32>
    %22 = arith.cmpi slt, %20, %21 : vector<1x1x128xi32>
    %23 = arith.extui %22 : vector<1x1x128xi1> to vector<1x1x128xi32>
    %24 = arith.sitofp %23 : vector<1x1x128xi32> to vector<1x1x128xf32>
    %cst_15 = arith.constant -1.000000e+30 : f32
    %25 = vector.shape_cast %22 : vector<1x1x128xi1> to vector<1x1x128xi1>
    %26 = vector.broadcast %25 : vector<1x1x128xi1> to vector<4x8x128xi1>
    %27 = vector.broadcast %cst_15 : f32 to vector<4x8x128xf32>
    %28 = arith.select %26, %6, %27 : vector<4x8x128xi1>, vector<4x8x128xf32>
    %cst_16 = arith.constant -1.000000e+30 : f32
    %29 = vector.shape_cast %22 : vector<1x1x128xi1> to vector<1x1x128xi1>
    %30 = vector.broadcast %29 : vector<1x1x128xi1> to vector<4x8x128xi1>
    %31 = vector.broadcast %cst_16 : f32 to vector<4x8x128xf32>
    %32 = arith.select %30, %9, %31 : vector<4x8x128xi1>, vector<4x8x128xf32>
    %cst_17 = arith.constant dense<0xFF800000> : vector<4x8xf32>
    %33 = vector.multi_reduction <maximumf>, %28, %cst_17 [2] : vector<4x8x128xf32> to vector<4x8xf32>
    %34 = vector.shape_cast %33 : vector<4x8xf32> to vector<4x8x1xf32>
    %cst_18 = arith.constant dense<0xFF800000> : vector<4x8xf32>
    %35 = vector.multi_reduction <maximumf>, %32, %cst_18 [2] : vector<4x8x128xf32> to vector<4x8xf32>
    %36 = vector.shape_cast %35 : vector<4x8xf32> to vector<4x8x1xf32>
    %cst_19 = arith.constant dense<0xFF800000> : vector<4x1xf32>
    %37 = vector.multi_reduction <maximumf>, %36, %cst_19 [1] : vector<4x8x1xf32> to vector<4x1xf32>
    %38 = vector.shape_cast %37 : vector<4x1xf32> to vector<4x1x1xf32>
    %39 = vector.broadcast %14 : vector<4x8x1xf32> to vector<4x8x128xf32>
    %40 = arith.subf %28, %39 : vector<4x8x128xf32>
    %41 = vector.broadcast %34 : vector<4x8x1xf32> to vector<4x8x128xf32>
    %42 = arith.subf %40, %41 : vector<4x8x128xf32>
    %43 = math.exp %42 : vector<4x8x128xf32>
    %cst_20 = arith.constant 9.99999974E-5 : f32
    %44 = vector.broadcast %cst_20 : f32 to vector<4x8x128xf32>
    %45 = arith.addf %43, %44 : vector<4x8x128xf32>
    %46 = vector.broadcast %24 : vector<1x1x128xf32> to vector<4x8x128xf32>
    %47 = arith.mulf %45, %46 : vector<4x8x128xf32>
    %48 = vector.broadcast %19 : vector<4x8x1xf32> to vector<4x8x128xf32>
    %49 = arith.subf %32, %48 : vector<4x8x128xf32>
    %50 = vector.broadcast %38 : vector<4x1x1xf32> to vector<4x8x128xf32>
    %51 = arith.subf %49, %50 : vector<4x8x128xf32>
    %52 = math.exp %51 : vector<4x8x128xf32>
    %cst_21 = arith.constant 9.99999974E-5 : f32
    %53 = vector.broadcast %cst_21 : f32 to vector<4x8x128xf32>
    %54 = arith.addf %52, %53 : vector<4x8x128xf32>
    %55 = vector.broadcast %24 : vector<1x1x128xf32> to vector<4x8x128xf32>
    %56 = arith.mulf %54, %55 : vector<4x8x128xf32>
    "tpu.trace_start"() <{level = 10 : i32, message = "gnm,gnv->gmv"}> : () -> ()
    %cst_22 = arith.constant dense<0.000000e+00> : vector<4x128x16xf32>
    %57 = tpu.matmul %56, %2, %cst_22 {dimension_numbers = #tpu.dot_dimension_numbers<[1], [1], [2], [2], [0, 0, 0, 2, 1, 2], [0], [0]>} : vector<4x8x128xf32>, vector<4x8x16xf32>, vector<4x128x16xf32> -> vector<4x128x16xf32>
    "tpu.trace_stop"() : () -> ()
    "tpu.trace_start"() <{level = 10 : i32, message = "gmv,gnm->gvn"}> : () -> ()
    %cst_23 = arith.constant dense<0.000000e+00> : vector<4x16x8xf32>
    %58 = tpu.matmul %57, %47, %cst_23 {dimension_numbers = #tpu.dot_dimension_numbers<[1], [2], [2], [1], [0, 0, 0, 2, 1, 1], [0], [0]>} : vector<4x128x16xf32>, vector<4x8x128xf32>, vector<4x16x8xf32> -> vector<4x16x8xf32>
    "tpu.trace_stop"() : () -> ()
    %cst_24 = arith.constant dense<0.000000e+00> : vector<4x128xf32>
    %59 = vector.multi_reduction <add>, %56, %cst_24 [1] : vector<4x8x128xf32> to vector<4x128xf32>
    %60 = vector.shape_cast %59 : vector<4x128xf32> to vector<4x1x128xf32>
    "tpu.trace_start"() <{level = 10 : i32, message = "gum,gnm->gun"}> : () -> ()
    %cst_25 = arith.constant dense<0.000000e+00> : vector<4x1x8xf32>
    %61 = tpu.matmul %60, %47, %cst_25 {dimension_numbers = #tpu.dot_dimension_numbers<[2], [2], [1], [1], [0, 0, 0, 1, 1, 1], [0], [0]>} : vector<4x1x128xf32>, vector<4x8x128xf32>, vector<4x1x8xf32> -> vector<4x1x8xf32>
    "tpu.trace_stop"() : () -> ()
    %62 = tpu.reciprocal %61 {approx = true} : vector<4x1x8xf32> -> vector<4x1x8xf32>
    %63 = vector.broadcast %62 : vector<4x1x8xf32> to vector<4x16x8xf32>
    %64 = arith.mulf %58, %63 : vector<4x16x8xf32>
    %c0_26 = arith.constant 0 : index
    %c0_27 = arith.constant 0 : index
    %c0_28 = arith.constant 0 : index
    %65 = vector.load %arg5[%c0_26, %c0_27, %c0_28] : memref<4x16x8xf32, #tpu.memory_space<vmem>>, vector<4x16x8xf32>
    tpu.vector_store %arg5[%c0_26, %c0_27, %c0_28], %64 {strides = array<i32>} : memref<4x16x8xf32, #tpu.memory_space<vmem>>, vector<4x16x8xf32>,
    return
  }
  func.func @transform_0(%arg0: i32) -> (i32, i32, i32) {
    %c0_i32 = arith.constant 0 : i32
    %c0_i32_0 = arith.constant 0 : i32
    %c0_i32_1 = arith.constant 0 : i32
    return %arg0, %c0_i32, %c0_i32_0 : i32, i32, i32
  }
  func.func @transform_1(%arg0: i32) -> (i32, i32, i32) {
    %c0_i32 = arith.constant 0 : i32
    %c0_i32_0 = arith.constant 0 : i32
    %c0_i32_1 = arith.constant 0 : i32
    return %arg0, %c0_i32, %c0_i32_0 : i32, i32, i32
  }
  func.func @transform_2(%arg0: i32) -> (i32, i32, i32) {
    %c0_i32 = arith.constant 0 : i32
    %c0_i32_0 = arith.constant 0 : i32
    %c0_i32_1 = arith.constant 0 : i32
    return %arg0, %c0_i32, %c0_i32_0 : i32, i32, i32
  }
  func.func @transform_3(%arg0: i32) -> (i32, i32) {
    %c0_i32 = arith.constant 0 : i32
    %c0_i32_0 = arith.constant 0 : i32
    %c0_i32_1 = arith.constant 0 : i32
    return %c0_i32, %c0_i32_0 : i32, i32
  }
  func.func @transform_4(%arg0: i32) -> (i32, i32, i32) {
    %c0_i32 = arith.constant 0 : i32
    %c0_i32_0 = arith.constant 0 : i32
    %c0_i32_1 = arith.constant 0 : i32
    return %arg0, %c0_i32, %c0_i32_0 : i32, i32, i32
  }
}

</mosaic_0001>

<llo_original>
// kernel: tpu_custom_call.1
$region0: #{tpu_custom_call.1}
  #allocation0 [shape = 'u32[]', space=smem, size = 0x4, offset = 0x4, fixed_abs, tag = 'smem constant byte address 0x4 - core index']
  #allocation1 [shape = 'u32[144,128]{1,0:T(1,128)}', space=vmem, size = 0x12000, scoped, tag = 'internal scratch']
  %s0 = inlined_call_operand.hbm [shape: f32[4,8,16], index: 0, kind: input, shape index: {}]
  %s1 = inlined_call_operand.hbm [shape: f32[4,8,16], index: 1, kind: input, shape index: {}]
  %s2 = inlined_call_operand.hbm [shape: f32[4,8,16], index: 2, kind: input, shape index: {}]
  %s3 = inlined_call_operand.hbm [shape: f32[16,128], index: 3, kind: input, shape index: {}]
  %s4 = inlined_call_operand.vmem [shape: f32[4,16,8], index: 4, kind: output, shape index: {}]
  %s5 = sld [smem:[#allocation0]]
  $region42: #{tpu_custom_call.1} parent=0
    _
  %s7 = ssub.s32 1, %s5
  %s8 = scalar_select 0, %s7, %s5
  $region1: #{tpu_custom_call.1} parent=0
    #allocation2 [shape = 'u8[16384]{0}', space=vmem, size = 0x4000, scoped, tag = 'input window, operand 0, single buffered']
    #allocation3 [shape = 's32[1]{0}', space=sflag, size = 0x4, scoped, tag = 'scoped memory for tpu_custom_call.1']
    #allocation4 [shape = 'u8[16384]{0}', space=vmem, size = 0x4000, scoped, tag = 'input window, operand 1, single buffered']
    #allocation5 [shape = 's32[1]{0}', space=sflag, size = 0x4, scoped, tag = 'scoped memory for tpu_custom_call.1']
    #allocation6 [shape = 'u8[16384]{0}', space=vmem, size = 0x4000, scoped, tag = 'input window, operand 2, single buffered']
    #allocation7 [shape = 'u8[8192]{0}', space=vmem, size = 0x2000, scoped, tag = 'input window, operand 3, single buffered']
    #allocation8 [shape = 's32[1]{0}', space=sflag, size = 0x4, scoped, tag = 'scoped memory for tpu_custom_call.1']
    %9 = vsyncpa [#allocation3], 0
    %10 = vsyncpa [#allocation5], 0
    %11 = vsyncpa [#allocation8], 0
    // Predicated region
    $region2: #{tpu_custom_call.1} parent=1 // pred_check
      _
    $region3: #{tpu_custom_call.1} parent=1 // pred_check_branch
      %13 = sbr.rel (0) target = $region5
    $region4: #{tpu_custom_call.1} parent=1 // pred_region
      %s15 = ssub.s32 512, 512
      %16 = vsyncadd [#allocation3], %s15
      %s17 = sshll.u32 [#allocation2], 4
      %s18 = int_to_ptr.vmem [resolvable:$true] %s17
      %23 = dma.hbm_to_vmem [thread:$0]  %s0, 512, %s18, [#allocation3], 128, 128, 8
    $region5: #{tpu_custom_call.1} parent=1 // pred_fallthru
      _
    // Predicated region
    $region6: #{tpu_custom_call.1} parent=1 // pred_check
      _
    $region7: #{tpu_custom_call.1} parent=1 // pred_check_branch
      %25 = sbr.rel (0) target = $region9
    $region8: #{tpu_custom_call.1} parent=1 // pred_region
      %s27 = ssub.s32 512, 512
      %28 = vsyncadd [#allocation5], %s27
      %s29 = sshll.u32 [#allocation4], 4
      %s30 = int_to_ptr.vmem [resolvable:$true] %s29
      %35 = dma.hbm_to_vmem [thread:$0]  %s1, 512, %s30, [#allocation5], 128, 128, 8
    $region9: #{tpu_custom_call.1} parent=1 // pred_fallthru
      _
    // Predicated region
    $region10: #{tpu_custom_call.1} parent=1 // pred_check
      _
    $region11: #{tpu_custom_call.1} parent=1 // pred_check_branch
      %37 = sbr.rel (0) target = $region13
    $region12: #{tpu_custom_call.1} parent=1 // pred_region
      %s39 = ssub.s32 512, 512
      %40 = vsyncadd [#allocation5], %s39
      %s41 = sshll.u32 [#allocation6], 4
      %s42 = int_to_ptr.vmem [resolvable:$true] %s41
      %47 = dma.hbm_to_vmem [thread:$0]  %s2, 512, %s42, [#allocation5], 128, 128, 8
    $region13: #{tpu_custom_call.1} parent=1 // pred_fallthru
      _
    // Predicated region
    $region14: #{tpu_custom_call.1} parent=1 // pred_check
      _
    $region15: #{tpu_custom_call.1} parent=1 // pred_check_branch
      %49 = sbr.rel (0) target = $region17
    $region16: #{tpu_custom_call.1} parent=1 // pred_region
      %s51 = ssub.s32 256, 256
      %52 = vsyncadd [#allocation8], %s51
      %s53 = sshll.u32 [#allocation7], 4
      %s54 = int_to_ptr.vmem [resolvable:$true] %s53
      %59 = dma.hbm_to_vmem [thread:$0]  %s3, 256, %s54, [#allocation8], 128, 128, 8
    $region17: #{tpu_custom_call.1} parent=1 // pred_fallthru
      _
    // Predicated region
    $region18: #{tpu_custom_call.1} parent=1 // pred_check
      _
    $region19: #{tpu_custom_call.1} parent=1 // pred_check_branch
      %61 = sbr.rel (0) target = $region21
    $region20: #{tpu_custom_call.1} parent=1 // pred_region
      %62 = dma.done [#allocation3], 512
    $region21: #{tpu_custom_call.1} parent=1 // pred_fallthru
      _
    // Predicated region
    $region22: #{tpu_custom_call.1} parent=1 // pred_check
      _
    $region23: #{tpu_custom_call.1} parent=1 // pred_check_branch
      %64 = sbr.rel (0) target = $region25
    $region24: #{tpu_custom_call.1} parent=1 // pred_region
      %65 = dma.done [#allocation5], 512
    $region25: #{tpu_custom_call.1} parent=1 // pred_fallthru
      _
    // Predicated region
    $region26: #{tpu_custom_call.1} parent=1 // pred_check
      _
    $region27: #{tpu_custom_call.1} parent=1 // pred_check_branch
      %67 = sbr.rel (0) target = $region29
    $region28: #{tpu_custom_call.1} parent=1 // pred_region
      %68 = dma.done [#allocation5], 512
    $region29: #{tpu_custom_call.1} parent=1 // pred_fallthru
      _
    // Predicated region
    $region30: #{tpu_custom_call.1} parent=1 // pred_check
      _
    $region31: #{tpu_custom_call.1} parent=1 // pred_check_branch
      %70 = sbr.rel (0) target = $region33
    $region32: #{tpu_custom_call.1} parent=1 // pred_region
      %71 = dma.done [#allocation8], 256
    $region33: #{tpu_custom_call.1} parent=1 // pred_fallthru
      _
    %v72 = vld [vmem:[#allocation2] sm:$0xff]
    %v73 = vld [vmem:[#allocation2 + $0x8] sm:$0xff]
    %v74 = vld [vmem:[#allocation2 + $0x10] sm:$0xff]
    %v75 = vld [vmem:[#allocation2 + $0x18] sm:$0xff]
    %v76 = vld [vmem:[#allocation4] sm:$0xff]
    %v77 = vld [vmem:[#allocation4 + $0x8] sm:$0xff]
    %v78 = vld [vmem:[#allocation4 + $0x10] sm:$0xff]
    %v79 = vld [vmem:[#allocation4 + $0x18] sm:$0xff]
    %v80 = vld [vmem:[#allocation6] sm:$0xff]
    %v81 = vld [vmem:[#allocation6 + $0x8] sm:$0xff]
    %v82 = vld [vmem:[#allocation6 + $0x10] sm:$0xff]
    %v83 = vld [vmem:[#allocation6 + $0x18] sm:$0xff]
    %v84 = vld [vmem:[#allocation7] sm:$0xff]
    %v85 = vld [vmem:[#allocation7 + $0x8] sm:$0xff]
    %vm86 = vcmask 130048
    %v88 = vsel %vm86, %v72, 0
    %v91 = vsel %vm86, %v73, 0
    %v94 = vsel %vm86, %v74, 0
    %v97 = vsel %vm86, %v75, 0
    %99 = vmatprep.subr.mxu0 0.0
    %100 = vmatpush1.msra.mxu0 %v84
    %101 = vmatprep.subr.mxu0 0.0
    %102 = vmatpush1.msra.mxu0 %v85
    %103 = vmatprep.subr.mxu0 0.0
    %104 = vmatpush1.msra.mxu0 0.0
    %105 = vmatprep.subr.mxu0 0.0
    %106 = vmatpush1.msra.mxu0 0.0
    %107 = vmatprep.subr.mxu0 0.0
    %108 = vmatpush1.msra.mxu0 0.0
    %109 = vmatprep.subr.mxu0 0.0
    %110 = vmatpush1.msra.mxu0 0.0
    %111 = vmatprep.subr.mxu0 0.0
    %112 = vmatpush1.msra.mxu0 0.0
    %113 = vmatprep.subr.mxu0 0.0
    %114 = vmatpush1.msra.mxu0 0.0
    %115 = vmatprep.subr.mxu0 0.0
    %116 = vmatpush1.msra.mxu0 0.0
    %117 = vmatprep.subr.mxu0 0.0
    %118 = vmatpush1.msra.mxu0 0.0
    %119 = vmatprep.subr.mxu0 0.0
    %120 = vmatpush1.msra.mxu0 0.0
    %121 = vmatprep.subr.mxu0 0.0
    %122 = vmatpush1.msra.mxu0 0.0
    %123 = vmatprep.subr.mxu0 0.0
    %124 = vmatpush1.msra.mxu0 0.0
    %125 = vmatprep.subr.mxu0 0.0
    %126 = vmatpush1.msra.mxu0 0.0
    %127 = vmatprep.subr.mxu0 0.0
    %128 = vmatpush1.msra.mxu0 0.0
    %129 = vmatprep.subr.mxu0 0.0
    %130 = vmatpush1.msra.mxu0 0.0
    %131 = vmatprep.subr.mxu0 0.0
    %132 = vmatpush1.msra.mxu0 0.0
    %133 = vmatprep.subr.mxu0 0.0
    %134 = vmatpush1.msra.mxu0 0.0
    %135 = vmatprep.subr.mxu0 0.0
    %136 = vmatpush1.msra.mxu0 0.0
    %137 = vmatprep.subr.mxu0 0.0
    %138 = vmatpush1.msra.mxu0 0.0
    %139 = vmatprep.subr.mxu0 0.0
    %140 = vmatpush1.msra.mxu0 0.0
    %141 = vmatprep.subr.mxu0 0.0
    %142 = vmatpush1.msra.mxu0 0.0
    %143 = vmatprep.subr.mxu0 0.0
    %144 = vmatpush1.msra.mxu0 0.0
    %145 = vmatprep.subr.mxu0 0.0
    %146 = vmatpush1.msra.mxu0 0.0
    %147 = vmatprep.subr.mxu0 0.0
    %148 = vmatpush1.msra.mxu0 0.0
    %149 = vmatprep.subr.mxu0 0.0
    %150 = vmatpush1.msra.mxu0 0.0
    %151 = vmatprep.subr.mxu0 0.0
    %152 = vmatpush1.msra.mxu0 0.0
    %153 = vmatprep.subr.mxu0 0.0
    %154 = vmatpush1.msra.mxu0 0.0
    %155 = vmatprep.subr.mxu0 0.0
    %156 = vmatpush1.msra.mxu0 0.0
    %157 = vmatprep.subr.mxu0 0.0
    %158 = vmatpush1.msra.mxu0 0.0
    %159 = vmatprep.subr.mxu0 0.0
    %160 = vmatpush1.msra.mxu0 0.0
    %161 = vmatprep.subr.mxu0 0.0
    %162 = vmatpush1.msra.mxu0 0.0
    %163 = vmatprep.mubr.f32.mxu0 0.0
    %164 = vmatmul.mubr.f32.gmra.mrb[0].mxu0 %v88
    %v165 = vpop.f32.mrb[0].mxu0
    %v166 = vadd.f32 0.0, %v165
    %v167 = vpop.f32.mrb[0].mxu0
    %168 = vmatprep.mubr.f32.mxu0 0.0
    %169 = vmatmul.mubr.f32.gmra.mrb[0].mxu0 %v91
    %v170 = vpop.f32.mrb[0].mxu0
    %v171 = vadd.f32 0.0, %v170
    %v172 = vpop.f32.mrb[0].mxu0
    %173 = vmatprep.mubr.f32.mxu0 0.0
    %174 = vmatmul.mubr.f32.gmra.mrb[0].mxu0 %v94
    %v175 = vpop.f32.mrb[0].mxu0
    %v176 = vadd.f32 0.0, %v175
    %v177 = vpop.f32.mrb[0].mxu0
    %178 = vmatprep.mubr.f32.mxu0 0.0
    %179 = vmatmul.mubr.f32.gmra.mrb[0].mxu0 %v97
    %v180 = vpop.f32.mrb[0].mxu0
    %v181 = vadd.f32 0.0, %v180
    %v182 = vpop.f32.mrb[0].mxu0
    %183 = vdwg.mxu0
    %v185 = vsel %vm86, %v76, 0
    %v188 = vsel %vm86, %v77, 0
    %v191 = vsel %vm86, %v78, 0
    %v194 = vsel %vm86, %v79, 0
    %196 = vmatprep.subr.mxu0 0.0
    %197 = vmatpush1.msra.mxu0 %v84
    %198 = vmatprep.subr.mxu0 0.0
    %199 = vmatpush1.msra.mxu0 %v85
    %200 = vmatprep.subr.mxu0 0.0
    %201 = vmatpush1.msra.mxu0 0.0
    %202 = vmatprep.subr.mxu0 0.0
    %203 = vmatpush1.msra.mxu0 0.0
    %204 = vmatprep.subr.mxu0 0.0
    %205 = vmatpush1.msra.mxu0 0.0
    %206 = vmatprep.subr.mxu0 0.0
    %207 = vmatpush1.msra.mxu0 0.0
    %208 = vmatprep.subr.mxu0 0.0
    %209 = vmatpush1.msra.mxu0 0.0
    %210 = vmatprep.subr.mxu0 0.0
    %211 = vmatpush1.msra.mxu0 0.0
    %212 = vmatprep.subr.mxu0 0.0
    %213 = vmatpush1.msra.mxu0 0.0
    %214 = vmatprep.subr.mxu0 0.0
    %215 = vmatpush1.msra.mxu0 0.0
    %216 = vmatprep.subr.mxu0 0.0
    %217 = vmatpush1.msra.mxu0 0.0
    %218 = vmatprep.subr.mxu0 0.0
    %219 = vmatpush1.msra.mxu0 0.0
    %220 = vmatprep.subr.mxu0 0.0
    %221 = vmatpush1.msra.mxu0 0.0
    %222 = vmatprep.subr.mxu0 0.0
    %223 = vmatpush1.msra.mxu0 0.0
    %224 = vmatprep.subr.mxu0 0.0
    %225 = vmatpush1.msra.mxu0 0.0
    %226 = vmatprep.subr.mxu0 0.0
    %227 = vmatpush1.msra.mxu0 0.0
    %228 = vmatprep.subr.mxu0 0.0
    %229 = vmatpush1.msra.mxu0 0.0
    %230 = vmatprep.subr.mxu0 0.0
    %231 = vmatpush1.msra.mxu0 0.0
    %232 = vmatprep.subr.mxu0 0.0
    %233 = vmatpush1.msra.mxu0 0.0
    %234 = vmatprep.subr.mxu0 0.0
    %235 = vmatpush1.msra.mxu0 0.0
    %236 = vmatprep.subr.mxu0 0.0
    %237 = vmatpush1.msra.mxu0 0.0
    %238 = vmatprep.subr.mxu0 0.0
    %239 = vmatpush1.msra.mxu0 0.0
    %240 = vmatprep.subr.mxu0 0.0
    %241 = vmatpush1.msra.mxu0 0.0
    %242 = vmatprep.subr.mxu0 0.0
    %243 = vmatpush1.msra.mxu0 0.0
    %244 = vmatprep.subr.mxu0 0.0
    %245 = vmatpush1.msra.mxu0 0.0
    %246 = vmatprep.subr.mxu0 0.0
    %247 = vmatpush1.msra.mxu0 0.0
    %248 = vmatprep.subr.mxu0 0.0
    %249 = vmatpush1.msra.mxu0 0.0
    %250 = vmatprep.subr.mxu0 0.0
    %251 = vmatpush1.msra.mxu0 0.0
    %252 = vmatprep.subr.mxu0 0.0
    %253 = vmatpush1.msra.mxu0 0.0
    %254 = vmatprep.subr.mxu0 0.0
    %255 = vmatpush1.msra.mxu0 0.0
    %256 = vmatprep.subr.mxu0 0.0
    %257 = vmatpush1.msra.mxu0 0.0
    %258 = vmatprep.subr.mxu0 0.0
    %259 = vmatpush1.msra.mxu0 0.0
    %260 = vmatprep.mubr.f32.mxu0 0.0
    %261 = vmatmul.mubr.f32.gmra.mrb[0].mxu0 %v185
    %v262 = vpop.f32.mrb[0].mxu0
    %v263 = vadd.f32 0.0, %v262
    %v264 = vpop.f32.mrb[0].mxu0
    %265 = vmatprep.mubr.f32.mxu0 0.0
    %266 = vmatmul.mubr.f32.gmra.mrb[0].mxu0 %v188
    %v267 = vpop.f32.mrb[0].mxu0
    %v268 = vadd.f32 0.0, %v267
    %v269 = vpop.f32.mrb[0].mxu0
    %270 = vmatprep.mubr.f32.mxu0 0.0
    %271 = vmatmul.mubr.f32.gmra.mrb[0].mxu0 %v191
    %v272 = vpop.f32.mrb[0].mxu0
    %v273 = vadd.f32 0.0, %v272
    %v274 = vpop.f32.mrb[0].mxu0
    %275 = vmatprep.mubr.f32.mxu0 0.0
    %276 = vmatmul.mubr.f32.gmra.mrb[0].mxu0 %v194
    %v277 = vpop.f32.mrb[0].mxu0
    %v278 = vadd.f32 0.0, %v277
    %v279 = vpop.f32.mrb[0].mxu0
    %280 = vdwg.mxu0
    %v281 = vmul.f32 %v72, %v72
    %v282 = vmul.f32 %v73, %v73
    %v283 = vmul.f32 %v74, %v74
    %v284 = vmul.f32 %v75, %v75
    %v285 = vsel %vm86, %v281, 0.0
    %286 = vadd.xlane.f32.xlu0 %v285
    %v287 = vpop.xlane.xlu0 %286
    %v288 = vsel %vm86, %v282, 0.0
    %289 = vadd.xlane.f32.xlu0 %v288
    %v290 = vpop.xlane.xlu0 %289
    %v291 = vsel %vm86, %v283, 0.0
    %292 = vadd.xlane.f32.xlu0 %v291
    %v293 = vpop.xlane.xlu0 %292
    %v294 = vsel %vm86, %v284, 0.0
    %295 = vadd.xlane.f32.xlu0 %v294
    %v296 = vpop.xlane.xlu0 %295
    %v297 = vmul.f32 %v287, 0.125
    %v298 = vmul.f32 %v290, 0.125
    %v299 = vmul.f32 %v293, 0.125
    %v300 = vmul.f32 %v296, 0.125
    %v301 = vmul.f32 %v76, %v76
    %v302 = vmul.f32 %v77, %v77
    %v303 = vmul.f32 %v78, %v78
    %v304 = vmul.f32 %v79, %v79
    %v305 = vsel %vm86, %v301, 0.0
    %306 = vadd.xlane.f32.xlu0 %v305
    %v307 = vpop.xlane.xlu0 %306
    %v308 = vsel %vm86, %v302, 0.0
    %309 = vadd.xlane.f32.xlu0 %v308
    %v310 = vpop.xlane.xlu0 %309
    %v311 = vsel %vm86, %v303, 0.0
    %312 = vadd.xlane.f32.xlu0 %v311
    %v313 = vpop.xlane.xlu0 %312
    %v314 = vsel %vm86, %v304, 0.0
    %315 = vadd.xlane.f32.xlu0 %v314
    %v316 = vpop.xlane.xlu0 %315
    %v317 = vmul.f32 %v307, 0.125
    %v318 = vmul.f32 %v310, 0.125
    %v319 = vmul.f32 %v313, 0.125
    %v320 = vmul.f32 %v316, 0.125
    %v321 = vlaneseq
    %v322 = vand.u32 %v321, 127
    %vm323 = vcmp.lt.s32.totalorder %v322, 44
    %v324 = vsel %vm323, 1, 0
    %v325 = vcvt.s32.f32 %v324
    %vm326 = vcmp.eq.s32.totalorder %v324, 1
    %v327 = vsel %vm326, %v166, -1e+30
    %v328 = vsel %vm326, %v171, -1e+30
    %v329 = vsel %vm326, %v176, -1e+30
    %v330 = vsel %vm326, %v181, -1e+30
    %v331 = vsel %vm326, %v263, -1e+30
    %v332 = vsel %vm326, %v268, -1e+30
    %v333 = vsel %vm326, %v273, -1e+30
    %v334 = vsel %vm326, %v278, -1e+30
    %335 = vmax.xlane.f32.xlu0 %v327
    %v336 = vpop.xlane.xlu0 %335
    %337 = vmax.xlane.f32.xlu0 %v328
    %v338 = vpop.xlane.xlu0 %337
    %339 = vmax.xlane.f32.xlu0 %v329
    %v340 = vpop.xlane.xlu0 %339
    %341 = vmax.xlane.f32.xlu0 %v330
    %v342 = vpop.xlane.xlu0 %341
    %343 = vmax.xlane.f32.xlu0 %v331
    %v344 = vpop.xlane.xlu0 %343
    %345 = vmax.xlane.f32.xlu0 %v332
    %v346 = vpop.xlane.xlu0 %345
    %347 = vmax.xlane.f32.xlu0 %v333
    %v348 = vpop.xlane.xlu0 %347
    %349 = vmax.xlane.f32.xlu0 %v334
    %v350 = vpop.xlane.xlu0 %349
    %v351 = vrot.slane %v344, 4
    %v352 = vmax.f32 %v344, %v351
    %v353 = vrot.slane %v352, 2
    %v354 = vmax.f32 %v352, %v353
    %v355 = vrot.slane %v354, 1
    %v356 = vmax.f32 %v354, %v355
    %v357 = vrot.slane %v346, 4
    %v358 = vmax.f32 %v346, %v357
    %v359 = vrot.slane %v358, 2
    %v360 = vmax.f32 %v358, %v359
    %v361 = vrot.slane %v360, 1
    %v362 = vmax.f32 %v360, %v361
    %v363 = vrot.slane %v348, 4
    %v364 = vmax.f32 %v348, %v363
    %v365 = vrot.slane %v364, 2
    %v366 = vmax.f32 %v364, %v365
    %v367 = vrot.slane %v366, 1
    %v368 = vmax.f32 %v366, %v367
    %v369 = vrot.slane %v350, 4
    %v370 = vmax.f32 %v350, %v369
    %v371 = vrot.slane %v370, 2
    %v372 = vmax.f32 %v370, %v371
    %v373 = vrot.slane %v372, 1
    %v374 = vmax.f32 %v372, %v373
    %v375 = vsub.f32 %v327, %v297
    %v376 = vsub.f32 %v328, %v298
    %v377 = vsub.f32 %v329, %v299
    %v378 = vsub.f32 %v330, %v300
    %v379 = vsub.f32 %v375, %v336
    %v380 = vsub.f32 %v376, %v338
    %v381 = vsub.f32 %v377, %v340
    %v382 = vsub.f32 %v378, %v342
    %v383 = vmul.f32 %v379, 1.442695
    %v384 = vpow.pop %v383
    %v385 = vmul.f32 %v380, 1.442695
    %v386 = vpow.pop %v385
    %v387 = vmul.f32 %v381, 1.442695
    %v388 = vpow.pop %v387
    %v389 = vmul.f32 %v382, 1.442695
    %v390 = vpow.pop %v389
    %v391 = vadd.f32 %v384, 0.0001
    %v392 = vadd.f32 %v386, 0.0001
    %v393 = vadd.f32 %v388, 0.0001
    %v394 = vadd.f32 %v390, 0.0001
    %v395 = vmul.f32 %v391, %v325
    %v396 = vmul.f32 %v392, %v325
    %v397 = vmul.f32 %v393, %v325
    %v398 = vmul.f32 %v394, %v325
    %v399 = vsub.f32 %v331, %v317
    %v400 = vsub.f32 %v332, %v318
    %v401 = vsub.f32 %v333, %v319
    %v402 = vsub.f32 %v334, %v320
    %v403 = vsub.f32 %v399, %v356
    %v404 = vsub.f32 %v400, %v362
    %v405 = vsub.f32 %v401, %v368
    %v406 = vsub.f32 %v402, %v374
    %v407 = vmul.f32 %v403, 1.442695
    %v408 = vpow.pop %v407
    %v409 = vmul.f32 %v404, 1.442695
    %v410 = vpow.pop %v409
    %v411 = vmul.f32 %v405, 1.442695
    %v412 = vpow.pop %v411
    %v413 = vmul.f32 %v406, 1.442695
    %v414 = vpow.pop %v413
    %v415 = vadd.f32 %v408, 0.0001
    %v416 = vadd.f32 %v410, 0.0001
    %v417 = vadd.f32 %v412, 0.0001
    %v418 = vadd.f32 %v414, 0.0001
    %v419 = vmul.f32 %v415, %v325
    %v420 = vmul.f32 %v416, %v325
    %v421 = vmul.f32 %v417, %v325
    %v422 = vmul.f32 %v418, %v325
    %423 = vxpose.xlu0.b32.start [1/16] %v419, 128
    %424 = vxpose.xlu0.b32.cont [2/16] 0.0, 128
    %425 = vxpose.xlu0.b32.cont [3/16] 0.0, 128
    %426 = vxpose.xlu0.b32.cont [4/16] 0.0, 128
    %427 = vxpose.xlu0.b32.cont [5/16] 0.0, 128
    %428 = vxpose.xlu0.b32.cont [6/16] 0.0, 128
    %429 = vxpose.xlu0.b32.cont [7/16] 0.0, 128
    %430 = vxpose.xlu0.b32.cont [8/16] 0.0, 128
    %431 = vxpose.xlu0.b32.cont [9/16] 0.0, 128
    %432 = vxpose.xlu0.b32.cont [10/16] 0.0, 128
    %433 = vxpose.xlu0.b32.cont [11/16] 0.0, 128
    %434 = vxpose.xlu0.b32.cont [12/16] 0.0, 128
    %435 = vxpose.xlu0.b32.cont [13/16] 0.0, 128
    %436 = vxpose.xlu0.b32.cont [14/16] 0.0, 128
    %437 = vxpose.xlu0.b32.cont [15/16] 0.0, 128
    %438 = vxpose.xlu0.b32.end [16/16] 0.0, 128
    %v439 = vpop.trf.xlu0
    %v440 = vpop.trf.xlu0
    %v441 = vpop.trf.xlu0
    %v442 = vpop.trf.xlu0
    %v443 = vpop.trf.xlu0
    %v444 = vpop.trf.xlu0
    %v445 = vpop.trf.xlu0
    %v446 = vpop.trf.xlu0
    %v447 = vpop.trf.xlu0
    %v448 = vpop.trf.xlu0
    %v449 = vpop.trf.xlu0
    %v450 = vpop.trf.xlu0
    %v451 = vpop.trf.xlu0
    %v452 = vpop.trf.xlu0
    %v453 = vpop.trf.xlu0
    %v454 = vpop.trf.xlu0
    %vm455 = vcmask 64512
    %v457 = vsel %vm455, %v439, 0
    %v460 = vsel %vm455, %v440, 0
    %v463 = vsel %vm455, %v441, 0
    %v466 = vsel %vm455, %v442, 0
    %v469 = vsel %vm455, %v443, 0
    %v472 = vsel %vm455, %v444, 0
    %v475 = vsel %vm455, %v445, 0
    %v478 = vsel %vm455, %v446, 0
    %v481 = vsel %vm455, %v447, 0
    %v484 = vsel %vm455, %v448, 0
    %v487 = vsel %vm455, %v449, 0
    %v490 = vsel %vm455, %v450, 0
    %v493 = vsel %vm455, %v451, 0
    %v496 = vsel %vm455, %v452, 0
    %v499 = vsel %vm455, %v453, 0
    %v502 = vsel %vm455, %v454, 0
    %504 = vmatprep.subr.mxu0 0.0
    %505 = vmatpush1.msra.mxu0 %v80
    %506 = vmatprep.subr.mxu0 0.0
    %507 = vmatpush1.msra.mxu0 0.0
    %508 = vmatprep.subr.mxu0 0.0
    %509 = vmatpush1.msra.mxu0 0.0
    %510 = vmatprep.subr.mxu0 0.0
    %511 = vmatpush1.msra.mxu0 0.0
    %512 = vmatprep.subr.mxu0 0.0
    %513 = vmatpush1.msra.mxu0 0.0
    %514 = vmatprep.subr.mxu0 0.0
    %515 = vmatpush1.msra.mxu0 0.0
    %516 = vmatprep.subr.mxu0 0.0
    %517 = vmatpush1.msra.mxu0 0.0
    %518 = vmatprep.subr.mxu0 0.0
    %519 = vmatpush1.msra.mxu0 0.0
    %520 = vmatprep.subr.mxu0 0.0
    %521 = vmatpush1.msra.mxu0 0.0
    %522 = vmatprep.subr.mxu0 0.0
    %523 = vmatpush1.msra.mxu0 0.0
    %524 = vmatprep.subr.mxu0 0.0
    %525 = vmatpush1.msra.mxu0 0.0
    %526 = vmatprep.subr.mxu0 0.0
    %527 = vmatpush1.msra.mxu0 0.0
    %528 = vmatprep.subr.mxu0 0.0
    %529 = vmatpush1.msra.mxu0 0.0
    %530 = vmatprep.subr.mxu0 0.0
    %531 = vmatpush1.msra.mxu0 0.0
    %532 = vmatprep.subr.mxu0 0.0
    %533 = vmatpush1.msra.mxu0 0.0
    %534 = vmatprep.subr.mxu0 0.0
    %535 = vmatpush1.msra.mxu0 0.0
    %536 = vmatprep.subr.mxu0 0.0
    %537 = vmatpush1.msra.mxu0 0.0
    %538 = vmatprep.subr.mxu0 0.0
    %539 = vmatpush1.msra.mxu0 0.0
    %540 = vmatprep.subr.mxu0 0.0
    %541 = vmatpush1.msra.mxu0 0.0
    %542 = vmatprep.subr.mxu0 0.0
    %543 = vmatpush1.msra.mxu0 0.0
    %544 = vmatprep.subr.mxu0 0.0
    %545 = vmatpush1.msra.mxu0 0.0
    %546 = vmatprep.subr.mxu0 0.0
    %547 = vmatpush1.msra.mxu0 0.0
    %548 = vmatprep.subr.mxu0 0.0
    %549 = vmatpush1.msra.mxu0 0.0
    %550 = vmatprep.subr.mxu0 0.0
    %551 = vmatpush1.msra.mxu0 0.0
    %552 = vmatprep.subr.mxu0 0.0
    %553 = vmatpush1.msra.mxu0 0.0
    %554 = vmatprep.subr.mxu0 0.0
    %555 = vmatpush1.msra.mxu0 0.0
    %556 = vmatprep.subr.mxu0 0.0
    %557 = vmatpush1.msra.mxu0 0.0
    %558 = vmatprep.subr.mxu0 0.0
    %559 = vmatpush1.msra.mxu0 0.0
    %560 = vmatprep.subr.mxu0 0.0
    %561 = vmatpush1.msra.mxu0 0.0
    %562 = vmatprep.subr.mxu0 0.0
    %563 = vmatpush1.msra.mxu0 0.0
    %564 = vmatprep.subr.mxu0 0.0
    %565 = vmatpush1.msra.mxu0 0.0
    %566 = vmatprep.subr.mxu0 0.0
    %567 = vmatpush1.msra.mxu0 0.0
    %568 = vmatprep.mubr.f32.mxu0 0.0
    %569 = vmatmul.mubr.f32.gmra.mrb[0].mxu0 %v457
    %v570 = vpop.f32.mrb[0].mxu0
    %v571 = vadd.f32 0.0, %v570
    %v572 = vpop.f32.mrb[0].mxu0
    %573 = vmatprep.mubr.f32.mxu0 0.0
    %574 = vmatmul.mubr.f32.gmra.mrb[0].mxu0 %v460
    %v575 = vpop.f32.mrb[0].mxu0
    %v576 = vadd.f32 0.0, %v575
    %v577 = vpop.f32.mrb[0].mxu0
    %578 = vmatprep.mubr.f32.mxu0 0.0
    %579 = vmatmul.mubr.f32.gmra.mrb[0].mxu0 %v463
    %v580 = vpop.f32.mrb[0].mxu0
    %v581 = vadd.f32 0.0, %v580
    %v582 = vpop.f32.mrb[0].mxu0
    %583 = vmatprep.mubr.f32.mxu0 0.0
    %584 = vmatmul.mubr.f32.gmra.mrb[0].mxu0 %v466
    %v585 = vpop.f32.mrb[0].mxu0
    %v586 = vadd.f32 0.0, %v585
    %v587 = vpop.f32.mrb[0].mxu0
    %588 = vmatprep.mubr.f32.mxu0 0.0
    %589 = vmatmul.mubr.f32.gmra.mrb[0].mxu0 %v469
    %v590 = vpop.f32.mrb[0].mxu0
    %v591 = vadd.f32 0.0, %v590
    %v592 = vpop.f32.mrb[0].mxu0
    %593 = vmatprep.mubr.f32.mxu0 0.0
    %594 = vmatmul.mubr.f32.gmra.mrb[0].mxu0 %v472
    %v595 = vpop.f32.mrb[0].mxu0
    %v596 = vadd.f32 0.0, %v595
    %v597 = vpop.f32.mrb[0].mxu0
    %598 = vmatprep.mubr.f32.mxu0 0.0
    %599 = vmatmul.mubr.f32.gmra.mrb[0].mxu0 %v475
    %v600 = vpop.f32.mrb[0].mxu0
    %v601 = vadd.f32 0.0, %v600
    %v602 = vpop.f32.mrb[0].mxu0
    %603 = vmatprep.mubr.f32.mxu0 0.0
    %604 = vmatmul.mubr.f32.gmra.mrb[0].mxu0 %v478
    %v605 = vpop.f32.mrb[0].mxu0
    %v606 = vadd.f32 0.0, %v605
    %v607 = vpop.f32.mrb[0].mxu0
    %608 = vmatprep.mubr.f32.mxu0 0.0
    %609 = vmatmul.mubr.f32.gmra.mrb[0].mxu0 %v481
    %v610 = vpop.f32.mrb[0].mxu0
    %v611 = vadd.f32 0.0, %v610
    %v612 = vpop.f32.mrb[0].mxu0
    %613 = vmatprep.mubr.f32.mxu0 0.0
    %614 = vmatmul.mubr.f32.gmra.mrb[0].mxu0 %v484
    %v615 = vpop.f32.mrb[0].mxu0
    %v616 = vadd.f32 0.0, %v615
    %v617 = vpop.f32.mrb[0].mxu0
    %618 = vmatprep.mubr.f32.mxu0 0.0
    %619 = vmatmul.mubr.f32.gmra.mrb[0].mxu0 %v487
    %v620 = vpop.f32.mrb[0].mxu0
    %v621 = vadd.f32 0.0, %v620
    %v622 = vpop.f32.mrb[0].mxu0
    %623 = vmatprep.mubr.f32.mxu0 0.0
    %624 = vmatmul.mubr.f32.gmra.mrb[0].mxu0 %v490
    %v625 = vpop.f32.mrb[0].mxu0
    %v626 = vadd.f32 0.0, %v625
    %v627 = vpop.f32.mrb[0].mxu0
    %628 = vmatprep.mubr.f32.mxu0 0.0
    %629 = vmatmul.mubr.f32.gmra.mrb[0].mxu0 %v493
    %v630 = vpop.f32.mrb[0].mxu0
    %v631 = vadd.f32 0.0, %v630
    %v632 = vpop.f32.mrb[0].mxu0
    %633 = vmatprep.mubr.f32.mxu0 0.0
    %634 = vmatmul.mubr.f32.gmra.mrb[0].mxu0 %v496
    %v635 = vpop.f32.mrb[0].mxu0
    %v636 = vadd.f32 0.0, %v635
    %v637 = vpop.f32.mrb[0].mxu0
    %638 = vmatprep.mubr.f32.mxu0 0.0
    %639 = vmatmul.mubr.f32.gmra.mrb[0].mxu0 %v499
    %v640 = vpop.f32.mrb[0].mxu0
    %v641 = vadd.f32 0.0, %v640
    %v642 = vpop.f32.mrb[0].mxu0
    %643 = vmatprep.mubr.f32.mxu0 0.0
    %644 = vmatmul.mubr.f32.gmra.mrb[0].mxu0 %v502
    %v645 = vpop.f32.mrb[0].mxu0
    %v646 = vadd.f32 0.0, %v645
    %v647 = vpop.f32.mrb[0].mxu0
    %648 = vdwg.mxu0
    %649 = vxpose.xlu0.b32.start [1/16] %v420, 128
    %650 = vxpose.xlu0.b32.cont [2/16] 0.0, 128
    %651 = vxpose.xlu0.b32.cont [3/16] 0.0, 128
    %652 = vxpose.xlu0.b32.cont [4/16] 0.0, 128
    %653 = vxpose.xlu0.b32.cont [5/16] 0.0, 128
    %654 = vxpose.xlu0.b32.cont [6/16] 0.0, 128
    %655 = vxpose.xlu0.b32.cont [7/16] 0.0, 128
    %656 = vxpose.xlu0.b32.cont [8/16] 0.0, 128
    %657 = vxpose.xlu0.b32.cont [9/16] 0.0, 128
    %658 = vxpose.xlu0.b32.cont [10/16] 0.0, 128
    %659 = vxpose.xlu0.b32.cont [11/16] 0.0, 128
    %660 = vxpose.xlu0.b32.cont [12/16] 0.0, 128
    %661 = vxpose.xlu0.b32.cont [13/16] 0.0, 128
    %662 = vxpose.xlu0.b32.cont [14/16] 0.0, 128
    %663 = vxpose.xlu0.b32.cont [15/16] 0.0, 128
    %664 = vxpose.xlu0.b32.end [16/16] 0.0, 128
    %v665 = vpop.trf.xlu0
    %v666 = vpop.trf.xlu0
    %v667 = vpop.trf.xlu0
    %v668 = vpop.trf.xlu0
    %v669 = vpop.trf.xlu0
    %v670 = vpop.trf.xlu0
    %v671 = vpop.trf.xlu0
    %v672 = vpop.trf.xlu0
    %v673 = vpop.trf.xlu0
    %v674 = vpop.trf.xlu0
    %v675 = vpop.trf.xlu0
    %v676 = vpop.trf.xlu0
    %v677 = vpop.trf.xlu0
    %v678 = vpop.trf.xlu0
    %v679 = vpop.trf.xlu0
    %v680 = vpop.trf.xlu0
    %v682 = vsel %vm455, %v665, 0
    %v685 = vsel %vm455, %v666, 0
    %v688 = vsel %vm455, %v667, 0
    %v691 = vsel %vm455, %v668, 0
    %v694 = vsel %vm455, %v669, 0
    %v697 = vsel %vm455, %v670, 0
    %v700 = vsel %vm455, %v671, 0
    %v703 = vsel %vm455, %v672, 0
    %v706 = vsel %vm455, %v673, 0
    %v709 = vsel %vm455, %v674, 0
    %v712 = vsel %vm455, %v675, 0
    %v715 = vsel %vm455, %v676, 0
    %v718 = vsel %vm455, %v677, 0
    %v721 = vsel %vm455, %v678, 0
    %v724 = vsel %vm455, %v679, 0
    %v727 = vsel %vm455, %v680, 0
    %729 = vmatprep.subr.mxu0 0.0
    %730 = vmatpush1.msra.mxu0 %v81
    %731 = vmatprep.subr.mxu0 0.0
    %732 = vmatpush1.msra.mxu0 0.0
    %733 = vmatprep.subr.mxu0 0.0
    %734 = vmatpush1.msra.mxu0 0.0
    %735 = vmatprep.subr.mxu0 0.0
    %736 = vmatpush1.msra.mxu0 0.0
    %737 = vmatprep.subr.mxu0 0.0
    %738 = vmatpush1.msra.mxu0 0.0
    %739 = vmatprep.subr.mxu0 0.0
    %740 = vmatpush1.msra.mxu0 0.0
    %741 = vmatprep.subr.mxu0 0.0
    %742 = vmatpush1.msra.mxu0 0.0
    %743 = vmatprep.subr.mxu0 0.0
    %744 = vmatpush1.msra.mxu0 0.0
    %745 = vmatprep.subr.mxu0 0.0
    %746 = vmatpush1.msra.mxu0 0.0
    %747 = vmatprep.subr.mxu0 0.0
    %748 = vmatpush1.msra.mxu0 0.0
    %749 = vmatprep.subr.mxu0 0.0
    %750 = vmatpush1.msra.mxu0 0.0
    %751 = vmatprep.subr.mxu0 0.0
    %752 = vmatpush1.msra.mxu0 0.0
    %753 = vmatprep.subr.mxu0 0.0
    %754 = vmatpush1.msra.mxu0 0.0
    %755 = vmatprep.subr.mxu0 0.0
    %756 = vmatpush1.msra.mxu0 0.0
    %757 = vmatprep.subr.mxu0 0.0
    %758 = vmatpush1.msra.mxu0 0.0
    %759 = vmatprep.subr.mxu0 0.0
    %760 = vmatpush1.msra.mxu0 0.0
    %761 = vmatprep.subr.mxu0 0.0
    %762 = vmatpush1.msra.mxu0 0.0
    %763 = vmatprep.subr.mxu0 0.0
    %764 = vmatpush1.msra.mxu0 0.0
    %765 = vmatprep.subr.mxu0 0.0
    %766 = vmatpush1.msra.mxu0 0.0
    %767 = vmatprep.subr.mxu0 0.0
    %768 = vmatpush1.msra.mxu0 0.0
    %769 = vmatprep.subr.mxu0 0.0
    %770 = vmatpush1.msra.mxu0 0.0
    %771 = vmatprep.subr.mxu0 0.0
    %772 = vmatpush1.msra.mxu0 0.0
    %773 = vmatprep.subr.mxu0 0.0
    %774 = vmatpush1.msra.mxu0 0.0
    %775 = vmatprep.subr.mxu0 0.0
    %776 = vmatpush1.msra.mxu0 0.0
    %777 = vmatprep.subr.mxu0 0.0
    %778 = vmatpush1.msra.mxu0 0.0
    %779 = vmatprep.subr.mxu0 0.0
    %780 = vmatpush1.msra.mxu0 0.0
    %781 = vmatprep.subr.mxu0 0.0
    %782 = vmatpush1.msra.mxu0 0.0
    %783 = vmatprep.subr.mxu0 0.0
    %784 = vmatpush1.msra.mxu0 0.0
    %785 = vmatprep.subr.mxu0 0.0
    %786 = vmatpush1.msra.mxu0 0.0
    %787 = vmatprep.subr.mxu0 0.0
    %788 = vmatpush1.msra.mxu0 0.0
    %789 = vmatprep.subr.mxu0 0.0
    %790 = vmatpush1.msra.mxu0 0.0
    %791 = vmatprep.subr.mxu0 0.0
    %792 = vmatpush1.msra.mxu0 0.0
    %793 = vmatprep.mubr.f32.mxu0 0.0
    %794 = vmatmul.mubr.f32.gmra.mrb[0].mxu0 %v682
    %v795 = vpop.f32.mrb[0].mxu0
    %v796 = vadd.f32 0.0, %v795
    %v797 = vpop.f32.mrb[0].mxu0
    %798 = vmatprep.mubr.f32.mxu0 0.0
    %799 = vmatmul.mubr.f32.gmra.mrb[0].mxu0 %v685
    %v800 = vpop.f32.mrb[0].mxu0
    %v801 = vadd.f32 0.0, %v800
    %v802 = vpop.f32.mrb[0].mxu0
    %803 = vmatprep.mubr.f32.mxu0 0.0
    %804 = vmatmul.mubr.f32.gmra.mrb[0].mxu0 %v688
    %v805 = vpop.f32.mrb[0].mxu0
    %v806 = vadd.f32 0.0, %v805
    %v807 = vpop.f32.mrb[0].mxu0
    %808 = vmatprep.mubr.f32.mxu0 0.0
    %809 = vmatmul.mubr.f32.gmra.mrb[0].mxu0 %v691
    %v810 = vpop.f32.mrb[0].mxu0
    %v811 = vadd.f32 0.0, %v810
    %v812 = vpop.f32.mrb[0].mxu0
    %813 = vmatprep.mubr.f32.mxu0 0.0
    %814 = vmatmul.mubr.f32.gmra.mrb[0].mxu0 %v694
    %v815 = vpop.f32.mrb[0].mxu0
    %v816 = vadd.f32 0.0, %v815
    %v817 = vpop.f32.mrb[0].mxu0
    %818 = vmatprep.mubr.f32.mxu0 0.0
    %819 = vmatmul.mubr.f32.gmra.mrb[0].mxu0 %v697
    %v820 = vpop.f32.mrb[0].mxu0
    %v821 = vadd.f32 0.0, %v820
    %v822 = vpop.f32.mrb[0].mxu0
    %823 = vmatprep.mubr.f32.mxu0 0.0
    %824 = vmatmul.mubr.f32.gmra.mrb[0].mxu0 %v700
    %v825 = vpop.f32.mrb[0].mxu0
    %v826 = vadd.f32 0.0, %v825
    %v827 = vpop.f32.mrb[0].mxu0
    %828 = vmatprep.mubr.f32.mxu0 0.0
    %829 = vmatmul.mubr.f32.gmra.mrb[0].mxu0 %v703
    %v830 = vpop.f32.mrb[0].mxu0
    %v831 = vadd.f32 0.0, %v830
    %v832 = vpop.f32.mrb[0].mxu0
    %833 = vmatprep.mubr.f32.mxu0 0.0
    %834 = vmatmul.mubr.f32.gmra.mrb[0].mxu0 %v706
    %v835 = vpop.f32.mrb[0].mxu0
    %v836 = vadd.f32 0.0, %v835
    %v837 = vpop.f32.mrb[0].mxu0
    %838 = vmatprep.mubr.f32.mxu0 0.0
    %839 = vmatmul.mubr.f32.gmra.mrb[0].mxu0 %v709
    %v840 = vpop.f32.mrb[0].mxu0
    %v841 = vadd.f32 0.0, %v840
    %v842 = vpop.f32.mrb[0].mxu0
    %843 = vmatprep.mubr.f32.mxu0 0.0
    %844 = vmatmul.mubr.f32.gmra.mrb[0].mxu0 %v712
    %v845 = vpop.f32.mrb[0].mxu0
    %v846 = vadd.f32 0.0, %v845
    %v847 = vpop.f32.mrb[0].mxu0
    %848 = vmatprep.mubr.f32.mxu0 0.0
    %849 = vmatmul.mubr.f32.gmra.mrb[0].mxu0 %v715
    %v850 = vpop.f32.mrb[0].mxu0
    %v851 = vadd.f32 0.0, %v850
    %v852 = vpop.f32.mrb[0].mxu0
    %853 = vmatprep.mubr.f32.mxu0 0.0
    %854 = vmatmul.mubr.f32.gmra.mrb[0].mxu0 %v718
    %v855 = vpop.f32.mrb[0].mxu0
    %v856 = vadd.f32 0.0, %v855
    %v857 = vpop.f32.mrb[0].mxu0
    %858 = vmatprep.mubr.f32.mxu0 0.0
    %859 = vmatmul.mubr.f32.gmra.mrb[0].mxu0 %v721
    %v860 = vpop.f32.mrb[0].mxu0
    %v861 = vadd.f32 0.0, %v860
    %v862 = vpop.f32.mrb[0].mxu0
    %863 = vmatprep.mubr.f32.mxu0 0.0
    %864 = vmatmul.mubr.f32.gmra.mrb[0].mxu0 %v724
    %v865 = vpop.f32.mrb[0].mxu0
    %v866 = vadd.f32 0.0, %v865
    %v867 = vpop.f32.mrb[0].mxu0
    %868 = vmatprep.mubr.f32.mxu0 0.0
    %869 = vmatmul.mubr.f32.gmra.mrb[0].mxu0 %v727
    %v870 = vpop.f32.mrb[0].mxu0
    %v871 = vadd.f32 0.0, %v870
    %v872 = vpop.f32.mrb[0].mxu0
    %873 = vdwg.mxu0
    %874 = vxpose.xlu0.b32.start [1/16] %v421, 128
    %875 = vxpose.xlu0.b32.cont [2/16] 0.0, 128
    %876 = vxpose.xlu0.b32.cont [3/16] 0.0, 128
    %877 = vxpose.xlu0.b32.cont [4/16] 0.0, 128
    %878 = vxpose.xlu0.b32.cont [5/16] 0.0, 128
    %879 = vxpose.xlu0.b32.cont [6/16] 0.0, 128
    %880 = vxpose.xlu0.b32.cont [7/16] 0.0, 128
    %881 = vxpose.xlu0.b32.cont [8/16] 0.0, 128
    %882 = vxpose.xlu0.b32.cont [9/16] 0.0, 128
    %883 = vxpose.xlu0.b32.cont [10/16] 0.0, 128
    %884 = vxpose.xlu0.b32.cont [11/16] 0.0, 128
    %885 = vxpose.xlu0.b32.cont [12/16] 0.0, 128
    %886 = vxpose.xlu0.b32.cont [13/16] 0.0, 128
    %887 = vxpose.xlu0.b32.cont [14/16] 0.0, 128
    %888 = vxpose.xlu0.b32.cont [15/16] 0.0, 128
    %889 = vxpose.xlu0.b32.end [16/16] 0.0, 128
    %v890 = vpop.trf.xlu0
    %v891 = vpop.trf.xlu0
    %v892 = vpop.trf.xlu0
    %v893 = vpop.trf.xlu0
    %v894 = vpop.trf.xlu0
    %v895 = vpop.trf.xlu0
    %v896 = vpop.trf.xlu0
    %v897 = vpop.trf.xlu0
    %v898 = vpop.trf.xlu0
    %v899 = vpop.trf.xlu0
    %v900 = vpop.trf.xlu0
    %v901 = vpop.trf.xlu0
    %v902 = vpop.trf.xlu0
    %v903 = vpop.trf.xlu0
    %v904 = vpop.trf.xlu0
    %v905 = vpop.trf.xlu0
    %v907 = vsel %vm455, %v890, 0
    %v910 = vsel %vm455, %v891, 0
    %v913 = vsel %vm455, %v892, 0
    %v916 = vsel %vm455, %v893, 0
    %v919 = vsel %vm455, %v894, 0
    %v922 = vsel %vm455, %v895, 0
    %v925 = vsel %vm455, %v896, 0
    %v928 = vsel %vm455, %v897, 0
    %v931 = vsel %vm455, %v898, 0
    %v934 = vsel %vm455, %v899, 0
    %v937 = vsel %vm455, %v900, 0
    %v940 = vsel %vm455, %v901, 0
    %v943 = vsel %vm455, %v902, 0
    %v946 = vsel %vm455, %v903, 0
    %v949 = vsel %vm455, %v904, 0
    %v952 = vsel %vm455, %v905, 0
    %954 = vmatprep.subr.mxu0 0.0
    %955 = vmatpush1.msra.mxu0 %v82
    %956 = vmatprep.subr.mxu0 0.0
    %957 = vmatpush1.msra.mxu0 0.0
    %958 = vmatprep.subr.mxu0 0.0
    %959 = vmatpush1.msra.mxu0 0.0
    %960 = vmatprep.subr.mxu0 0.0
    %961 = vmatpush1.msra.mxu0 0.0
    %962 = vmatprep.subr.mxu0 0.0
    %963 = vmatpush1.msra.mxu0 0.0
    %964 = vmatprep.subr.mxu0 0.0
    %965 = vmatpush1.msra.mxu0 0.0
    %966 = vmatprep.subr.mxu0 0.0
    %967 = vmatpush1.msra.mxu0 0.0
    %968 = vmatprep.subr.mxu0 0.0
    %969 = vmatpush1.msra.mxu0 0.0
    %970 = vmatprep.subr.mxu0 0.0
    %971 = vmatpush1.msra.mxu0 0.0
    %972 = vmatprep.subr.mxu0 0.0
    %973 = vmatpush1.msra.mxu0 0.0
    %974 = vmatprep.subr.mxu0 0.0
    %975 = vmatpush1.msra.mxu0 0.0
    %976 = vmatprep.subr.mxu0 0.0
    %977 = vmatpush1.msra.mxu0 0.0
    %978 = vmatprep.subr.mxu0 0.0
    %979 = vmatpush1.msra.mxu0 0.0
    %980 = vmatprep.subr.mxu0 0.0
    %981 = vmatpush1.msra.mxu0 0.0
    %982 = vmatprep.subr.mxu0 0.0
    %983 = vmatpush1.msra.mxu0 0.0
    %984 = vmatprep.subr.mxu0 0.0
    %985 = vmatpush1.msra.mxu0 0.0
    %986 = vmatprep.subr.mxu0 0.0
    %987 = vmatpush1.msra.mxu0 0.0
    %988 = vmatprep.subr.mxu0 0.0
    %989 = vmatpush1.msra.mxu0 0.0
    %990 = vmatprep.subr.mxu0 0.0
    %991 = vmatpush1.msra.mxu0 0.0
    %992 = vmatprep.subr.mxu0 0.0
    %993 = vmatpush1.msra.mxu0 0.0
    %994 = vmatprep.subr.mxu0 0.0
    %995 = vmatpush1.msra.mxu0 0.0
    %996 = vmatprep.subr.mxu0 0.0
    %997 = vmatpush1.msra.mxu0 0.0
    %998 = vmatprep.subr.mxu0 0.0
    %999 = vmatpush1.msra.mxu0 0.0
    %1000 = vmatprep.subr.mxu0 0.0
    %1001 = vmatpush1.msra.mxu0 0.0
    %1002 = vmatprep.subr.mxu0 0.0
    %1003 = vmatpush1.msra.mxu0 0.0
    %1004 = vmatprep.subr.mxu0 0.0
    %1005 = vmatpush1.msra.mxu0 0.0
    %1006 = vmatprep.subr.mxu0 0.0
    %1007 = vmatpush1.msra.mxu0 0.0
    %1008 = vmatprep.subr.mxu0 0.0
    %1009 = vmatpush1.msra.mxu0 0.0
    %1010 = vmatprep.subr.mxu0 0.0
    %1011 = vmatpush1.msra.mxu0 0.0
    %1012 = vmatprep.subr.mxu0 0.0
    %1013 = vmatpush1.msra.mxu0 0.0
    %1014 = vmatprep.subr.mxu0 0.0
    %1015 = vmatpush1.msra.mxu0 0.0
    %1016 = vmatprep.subr.mxu0 0.0
    %1017 = vmatpush1.msra.mxu0 0.0
    %1018 = vmatprep.mubr.f32.mxu0 0.0
    %1019 = vmatmul.mubr.f32.gmra.mrb[0].mxu0 %v907
    %v1020 = vpop.f32.mrb[0].mxu0
    %v1021 = vadd.f32 0.0, %v1020
    %v1022 = vpop.f32.mrb[0].mxu0
    %1023 = vmatprep.mubr.f32.mxu0 0.0
    %1024 = vmatmul.mubr.f32.gmra.mrb[0].mxu0 %v910
    %v1025 = vpop.f32.mrb[0].mxu0
    %v1026 = vadd.f32 0.0, %v1025
    %v1027 = vpop.f32.mrb[0].mxu0
    %1028 = vmatprep.mubr.f32.mxu0 0.0
    %1029 = vmatmul.mubr.f32.gmra.mrb[0].mxu0 %v913
    %v1030 = vpop.f32.mrb[0].mxu0
    %v1031 = vadd.f32 0.0, %v1030
    %v1032 = vpop.f32.mrb[0].mxu0
    %1033 = vmatprep.mubr.f32.mxu0 0.0
    %1034 = vmatmul.mubr.f32.gmra.mrb[0].mxu0 %v916
    %v1035 = vpop.f32.mrb[0].mxu0
    %v1036 = vadd.f32 0.0, %v1035
    %v1037 = vpop.f32.mrb[0].mxu0
    %1038 = vmatprep.mubr.f32.mxu0 0.0
    %1039 = vmatmul.mubr.f32.gmra.mrb[0].mxu0 %v919
    %v1040 = vpop.f32.mrb[0].mxu0
    %v1041 = vadd.f32 0.0, %v1040
    %v1042 = vpop.f32.mrb[0].mxu0
    %1043 = vmatprep.mubr.f32.mxu0 0.0
    %1044 = vmatmul.mubr.f32.gmra.mrb[0].mxu0 %v922
    %v1045 = vpop.f32.mrb[0].mxu0
    %v1046 = vadd.f32 0.0, %v1045
    %v1047 = vpop.f32.mrb[0].mxu0
    %1048 = vmatprep.mubr.f32.mxu0 0.0
    %1049 = vmatmul.mubr.f32.gmra.mrb[0].mxu0 %v925
    %v1050 = vpop.f32.mrb[0].mxu0
    %v1051 = vadd.f32 0.0, %v1050
    %v1052 = vpop.f32.mrb[0].mxu0
    %1053 = vmatprep.mubr.f32.mxu0 0.0
    %1054 = vmatmul.mubr.f32.gmra.mrb[0].mxu0 %v928
    %v1055 = vpop.f32.mrb[0].mxu0
    %v1056 = vadd.f32 0.0, %v1055
    %v1057 = vpop.f32.mrb[0].mxu0
    %1058 = vmatprep.mubr.f32.mxu0 0.0
    %1059 = vmatmul.mubr.f32.gmra.mrb[0].mxu0 %v931
    %v1060 = vpop.f32.mrb[0].mxu0
    %v1061 = vadd.f32 0.0, %v1060
    %v1062 = vpop.f32.mrb[0].mxu0
    %1063 = vmatprep.mubr.f32.mxu0 0.0
    %1064 = vmatmul.mubr.f32.gmra.mrb[0].mxu0 %v934
    %v1065 = vpop.f32.mrb[0].mxu0
    %v1066 = vadd.f32 0.0, %v1065
    %v1067 = vpop.f32.mrb[0].mxu0
    %1068 = vmatprep.mubr.f32.mxu0 0.0
    %1069 = vmatmul.mubr.f32.gmra.mrb[0].mxu0 %v937
    %v1070 = vpop.f32.mrb[0].mxu0
    %v1071 = vadd.f32 0.0, %v1070
    %v1072 = vpop.f32.mrb[0].mxu0
    %1073 = vmatprep.mubr.f32.mxu0 0.0
    %1074 = vmatmul.mubr.f32.gmra.mrb[0].mxu0 %v940
    %v1075 = vpop.f32.mrb[0].mxu0
    %v1076 = vadd.f32 0.0, %v1075
    %v1077 = vpop.f32.mrb[0].mxu0
    %1078 = vmatprep.mubr.f32.mxu0 0.0
    %1079 = vmatmul.mubr.f32.gmra.mrb[0].mxu0 %v943
    %v1080 = vpop.f32.mrb[0].mxu0
    %v1081 = vadd.f32 0.0, %v1080
    %v1082 = vpop.f32.mrb[0].mxu0
    %1083 = vmatprep.mubr.f32.mxu0 0.0
    %1084 = vmatmul.mubr.f32.gmra.mrb[0].mxu0 %v946
    %v1085 = vpop.f32.mrb[0].mxu0
    %v1086 = vadd.f32 0.0, %v1085
    %v1087 = vpop.f32.mrb[0].mxu0
    %1088 = vmatprep.mubr.f32.mxu0 0.0
    %1089 = vmatmul.mubr.f32.gmra.mrb[0].mxu0 %v949
    %v1090 = vpop.f32.mrb[0].mxu0
    %v1091 = vadd.f32 0.0, %v1090
    %v1092 = vpop.f32.mrb[0].mxu0
    %1093 = vmatprep.mubr.f32.mxu0 0.0
    %1094 = vmatmul.mubr.f32.gmra.mrb[0].mxu0 %v952
    %v1095 = vpop.f32.mrb[0].mxu0
    %v1096 = vadd.f32 0.0, %v1095
    %v1097 = vpop.f32.mrb[0].mxu0
    %1098 = vdwg.mxu0
    %1099 = vxpose.xlu0.b32.start [1/16] %v422, 128
    %1100 = vxpose.xlu0.b32.cont [2/16] 0.0, 128
    %1101 = vxpose.xlu0.b32.cont [3/16] 0.0, 128
    %1102 = vxpose.xlu0.b32.cont [4/16] 0.0, 128
    %1103 = vxpose.xlu0.b32.cont [5/16] 0.0, 128
    %1104 = vxpose.xlu0.b32.cont [6/16] 0.0, 128
    %1105 = vxpose.xlu0.b32.cont [7/16] 0.0, 128
    %1106 = vxpose.xlu0.b32.cont [8/16] 0.0, 128
    %1107 = vxpose.xlu0.b32.cont [9/16] 0.0, 128
    %1108 = vxpose.xlu0.b32.cont [10/16] 0.0, 128
    %1109 = vxpose.xlu0.b32.cont [11/16] 0.0, 128
    %1110 = vxpose.xlu0.b32.cont [12/16] 0.0, 128
    %1111 = vxpose.xlu0.b32.cont [13/16] 0.0, 128
    %1112 = vxpose.xlu0.b32.cont [14/16] 0.0, 128
    %1113 = vxpose.xlu0.b32.cont [15/16] 0.0, 128
    %1114 = vxpose.xlu0.b32.end [16/16] 0.0, 128
    %v1115 = vpop.trf.xlu0
    %v1116 = vpop.trf.xlu0
    %v1117 = vpop.trf.xlu0
    %v1118 = vpop.trf.xlu0
    %v1119 = vpop.trf.xlu0
    %v1120 = vpop.trf.xlu0
    %v1121 = vpop.trf.xlu0
    %v1122 = vpop.trf.xlu0
    %v1123 = vpop.trf.xlu0
    %v1124 = vpop.trf.xlu0
    %v1125 = vpop.trf.xlu0
    %v1126 = vpop.trf.xlu0
    %v1127 = vpop.trf.xlu0
    %v1128 = vpop.trf.xlu0
    %v1129 = vpop.trf.xlu0
    %v1130 = vpop.trf.xlu0
    %v1132 = vsel %vm455, %v1115, 0
    %v1135 = vsel %vm455, %v1116, 0
    %v1138 = vsel %vm455, %v1117, 0
    %v1141 = vsel %vm455, %v1118, 0
    %v1144 = vsel %vm455, %v1119, 0
    %v1147 = vsel %vm455, %v1120, 0
    %v1150 = vsel %vm455, %v1121, 0
    %v1153 = vsel %vm455, %v1122, 0
    %v1156 = vsel %vm455, %v1123, 0
    %v1159 = vsel %vm455, %v1124, 0
    %v1162 = vsel %vm455, %v1125, 0
    %v1165 = vsel %vm455, %v1126, 0
    %v1168 = vsel %vm455, %v1127, 0
    %v1171 = vsel %vm455, %v1128, 0
    %v1174 = vsel %vm455, %v1129, 0
    %v1177 = vsel %vm455, %v1130, 0
    %1179 = vmatprep.subr.mxu0 0.0
    %1180 = vmatpush1.msra.mxu0 %v83
    %1181 = vmatprep.subr.mxu0 0.0
    %1182 = vmatpush1.msra.mxu0 0.0
    %1183 = vmatprep.subr.mxu0 0.0
    %1184 = vmatpush1.msra.mxu0 0.0
    %1185 = vmatprep.subr.mxu0 0.0
    %1186 = vmatpush1.msra.mxu0 0.0
    %1187 = vmatprep.subr.mxu0 0.0
    %1188 = vmatpush1.msra.mxu0 0.0
    %1189 = vmatprep.subr.mxu0 0.0
    %1190 = vmatpush1.msra.mxu0 0.0
    %1191 = vmatprep.subr.mxu0 0.0
    %1192 = vmatpush1.msra.mxu0 0.0
    %1193 = vmatprep.subr.mxu0 0.0
    %1194 = vmatpush1.msra.mxu0 0.0
    %1195 = vmatprep.subr.mxu0 0.0
    %1196 = vmatpush1.msra.mxu0 0.0
    %1197 = vmatprep.subr.mxu0 0.0
    %1198 = vmatpush1.msra.mxu0 0.0
    %1199 = vmatprep.subr.mxu0 0.0
    %1200 = vmatpush1.msra.mxu0 0.0
    %1201 = vmatprep.subr.mxu0 0.0
    %1202 = vmatpush1.msra.mxu0 0.0
    %1203 = vmatprep.subr.mxu0 0.0
    %1204 = vmatpush1.msra.mxu0 0.0
    %1205 = vmatprep.subr.mxu0 0.0
    %1206 = vmatpush1.msra.mxu0 0.0
    %1207 = vmatprep.subr.mxu0 0.0
    %1208 = vmatpush1.msra.mxu0 0.0
    %1209 = vmatprep.subr.mxu0 0.0
    %1210 = vmatpush1.msra.mxu0 0.0
    %1211 = vmatprep.subr.mxu0 0.0
    %1212 = vmatpush1.msra.mxu0 0.0
    %1213 = vmatprep.subr.mxu0 0.0
    %1214 = vmatpush1.msra.mxu0 0.0
    %1215 = vmatprep.subr.mxu0 0.0
    %1216 = vmatpush1.msra.mxu0 0.0
    %1217 = vmatprep.subr.mxu0 0.0
    %1218 = vmatpush1.msra.mxu0 0.0
    %1219 = vmatprep.subr.mxu0 0.0
    %1220 = vmatpush1.msra.mxu0 0.0
    %1221 = vmatprep.subr.mxu0 0.0
    %1222 = vmatpush1.msra.mxu0 0.0
    %1223 = vmatprep.subr.mxu0 0.0
    %1224 = vmatpush1.msra.mxu0 0.0
    %1225 = vmatprep.subr.mxu0 0.0
    %1226 = vmatpush1.msra.mxu0 0.0
    %1227 = vmatprep.subr.mxu0 0.0
    %1228 = vmatpush1.msra.mxu0 0.0
    %1229 = vmatprep.subr.mxu0 0.0
    %1230 = vmatpush1.msra.mxu0 0.0
    %1231 = vmatprep.subr.mxu0 0.0
    %1232 = vmatpush1.msra.mxu0 0.0
    %1233 = vmatprep.subr.mxu0 0.0
    %1234 = vmatpush1.msra.mxu0 0.0
    %1235 = vmatprep.subr.mxu0 0.0
    %1236 = vmatpush1.msra.mxu0 0.0
    %1237 = vmatprep.subr.mxu0 0.0
    %1238 = vmatpush1.msra.mxu0 0.0
    %1239 = vmatprep.subr.mxu0 0.0
    %1240 = vmatpush1.msra.mxu0 0.0
    %1241 = vmatprep.subr.mxu0 0.0
    %1242 = vmatpush1.msra.mxu0 0.0
    %1243 = vmatprep.mubr.f32.mxu0 0.0
    %1244 = vmatmul.mubr.f32.gmra.mrb[0].mxu0 %v1132
    %v1245 = vpop.f32.mrb[0].mxu0
    %v1246 = vadd.f32 0.0, %v1245
    %v1247 = vpop.f32.mrb[0].mxu0
    %1248 = vmatprep.mubr.f32.mxu0 0.0
    %1249 = vmatmul.mubr.f32.gmra.mrb[0].mxu0 %v1135
    %v1250 = vpop.f32.mrb[0].mxu0
    %v1251 = vadd.f32 0.0, %v1250
    %v1252 = vpop.f32.mrb[0].mxu0
    %1253 = vmatprep.mubr.f32.mxu0 0.0
    %1254 = vmatmul.mubr.f32.gmra.mrb[0].mxu0 %v1138
    %v1255 = vpop.f32.mrb[0].mxu0
    %v1256 = vadd.f32 0.0, %v1255
    %v1257 = vpop.f32.mrb[0].mxu0
    %1258 = vmatprep.mubr.f32.mxu0 0.0
    %1259 = vmatmul.mubr.f32.gmra.mrb[0].mxu0 %v1141
    %v1260 = vpop.f32.mrb[0].mxu0
    %v1261 = vadd.f32 0.0, %v1260
    %v1262 = vpop.f32.mrb[0].mxu0
    %1263 = vmatprep.mubr.f32.mxu0 0.0
    %1264 = vmatmul.mubr.f32.gmra.mrb[0].mxu0 %v1144
    %v1265 = vpop.f32.mrb[0].mxu0
    %v1266 = vadd.f32 0.0, %v1265
    %v1267 = vpop.f32.mrb[0].mxu0
    %1268 = vmatprep.mubr.f32.mxu0 0.0
    %1269 = vmatmul.mubr.f32.gmra.mrb[0].mxu0 %v1147
    %v1270 = vpop.f32.mrb[0].mxu0
    %v1271 = vadd.f32 0.0, %v1270
    %v1272 = vpop.f32.mrb[0].mxu0
    %1273 = vmatprep.mubr.f32.mxu0 0.0
    %1274 = vmatmul.mubr.f32.gmra.mrb[0].mxu0 %v1150
    %v1275 = vpop.f32.mrb[0].mxu0
    %v1276 = vadd.f32 0.0, %v1275
    %v1277 = vpop.f32.mrb[0].mxu0
    %1278 = vmatprep.mubr.f32.mxu0 0.0
    %1279 = vmatmul.mubr.f32.gmra.mrb[0].mxu0 %v1153
    %v1280 = vpop.f32.mrb[0].mxu0
    %v1281 = vadd.f32 0.0, %v1280
    %v1282 = vpop.f32.mrb[0].mxu0
    %1283 = vmatprep.mubr.f32.mxu0 0.0
    %1284 = vmatmul.mubr.f32.gmra.mrb[0].mxu0 %v1156
    %v1285 = vpop.f32.mrb[0].mxu0
    %v1286 = vadd.f32 0.0, %v1285
    %v1287 = vpop.f32.mrb[0].mxu0
    %1288 = vmatprep.mubr.f32.mxu0 0.0
    %1289 = vmatmul.mubr.f32.gmra.mrb[0].mxu0 %v1159
    %v1290 = vpop.f32.mrb[0].mxu0
    %v1291 = vadd.f32 0.0, %v1290
    %v1292 = vpop.f32.mrb[0].mxu0
    %1293 = vmatprep.mubr.f32.mxu0 0.0
    %1294 = vmatmul.mubr.f32.gmra.mrb[0].mxu0 %v1162
    %v1295 = vpop.f32.mrb[0].mxu0
    %v1296 = vadd.f32 0.0, %v1295
    %v1297 = vpop.f32.mrb[0].mxu0
    %1298 = vmatprep.mubr.f32.mxu0 0.0
    %1299 = vmatmul.mubr.f32.gmra.mrb[0].mxu0 %v1165
    %v1300 = vpop.f32.mrb[0].mxu0
    %v1301 = vadd.f32 0.0, %v1300
    %v1302 = vpop.f32.mrb[0].mxu0
    %1303 = vmatprep.mubr.f32.mxu0 0.0
    %1304 = vmatmul.mubr.f32.gmra.mrb[0].mxu0 %v1168
    %v1305 = vpop.f32.mrb[0].mxu0
    %v1306 = vadd.f32 0.0, %v1305
    %v1307 = vpop.f32.mrb[0].mxu0
    %1308 = vmatprep.mubr.f32.mxu0 0.0
    %1309 = vmatmul.mubr.f32.gmra.mrb[0].mxu0 %v1171
    %v1310 = vpop.f32.mrb[0].mxu0
    %v1311 = vadd.f32 0.0, %v1310
    %v1312 = vpop.f32.mrb[0].mxu0
    %1313 = vmatprep.mubr.f32.mxu0 0.0
    %1314 = vmatmul.mubr.f32.gmra.mrb[0].mxu0 %v1174
    %v1315 = vpop.f32.mrb[0].mxu0
    %v1316 = vadd.f32 0.0, %v1315
    %v1317 = vpop.f32.mrb[0].mxu0
    %1318 = vmatprep.mubr.f32.mxu0 0.0
    %1319 = vmatmul.mubr.f32.gmra.mrb[0].mxu0 %v1177
    %v1320 = vpop.f32.mrb[0].mxu0
    %v1321 = vadd.f32 0.0, %v1320
    %v1322 = vpop.f32.mrb[0].mxu0
    %1323 = vdwg.mxu0
    %1324 = vxpose.xlu0.b32.start [1/16] %v571, 128
    %1325 = vxpose.xlu0.b32.cont [2/16] %v576, 128
    %1326 = vxpose.xlu0.b32.cont [3/16] %v581, 128
    %1327 = vxpose.xlu0.b32.cont [4/16] %v586, 128
    %1328 = vxpose.xlu0.b32.cont [5/16] %v591, 128
    %1329 = vxpose.xlu0.b32.cont [6/16] %v596, 128
    %1330 = vxpose.xlu0.b32.cont [7/16] %v601, 128
    %1331 = vxpose.xlu0.b32.cont [8/16] %v606, 128
    %1332 = vxpose.xlu0.b32.cont [9/16] %v611, 128
    %1333 = vxpose.xlu0.b32.cont [10/16] %v616, 128
    %1334 = vxpose.xlu0.b32.cont [11/16] %v621, 128
    %1335 = vxpose.xlu0.b32.cont [12/16] %v626, 128
    %1336 = vxpose.xlu0.b32.cont [13/16] %v631, 128
    %1337 = vxpose.xlu0.b32.cont [14/16] %v636, 128
    %1338 = vxpose.xlu0.b32.cont [15/16] %v641, 128
    %1339 = vxpose.xlu0.b32.end [16/16] %v646, 128
    %v1340 = vpop.trf.xlu0
    %v1341 = vpop.trf.xlu0
    %v1342 = vpop.trf.xlu0
    %v1343 = vpop.trf.xlu0
    %v1344 = vpop.trf.xlu0
    %v1345 = vpop.trf.xlu0
    %v1346 = vpop.trf.xlu0
    %v1347 = vpop.trf.xlu0
    %v1348 = vpop.trf.xlu0
    %v1349 = vpop.trf.xlu0
    %v1350 = vpop.trf.xlu0
    %v1351 = vpop.trf.xlu0
    %v1352 = vpop.trf.xlu0
    %v1353 = vpop.trf.xlu0
    %v1354 = vpop.trf.xlu0
    %v1355 = vpop.trf.xlu0
    %1356 = vmatprep.subr.mxu0 0.0
    %1357 = vmatpush1.xpose.msra.mxu0 %v395
    %1358 = vmatprep.subr.mxu0 0.0
    %1359 = vmatpush1.xpose.msra.mxu0 0.0
    %1360 = vmatprep.subr.mxu0 0.0
    %1361 = vmatpush1.xpose.msra.mxu0 0.0
    %1362 = vmatprep.subr.mxu0 0.0
    %1363 = vmatpush1.xpose.msra.mxu0 0.0
    %1364 = vmatprep.subr.mxu0 0.0
    %1365 = vmatpush1.xpose.msra.mxu0 0.0
    %1366 = vmatprep.subr.mxu0 0.0
    %1367 = vmatpush1.xpose.msra.mxu0 0.0
    %1368 = vmatprep.subr.mxu0 0.0
    %1369 = vmatpush1.xpose.msra.mxu0 0.0
    %1370 = vmatprep.subr.mxu0 0.0
    %1371 = vmatpush1.xpose.msra.mxu0 0.0
    %1372 = vmatprep.subr.mxu0 0.0
    %1373 = vmatpush1.xpose.msra.mxu0 0.0
    %1374 = vmatprep.subr.mxu0 0.0
    %1375 = vmatpush1.xpose.msra.mxu0 0.0
    %1376 = vmatprep.subr.mxu0 0.0
    %1377 = vmatpush1.xpose.msra.mxu0 0.0
    %1378 = vmatprep.subr.mxu0 0.0
    %1379 = vmatpush1.xpose.msra.mxu0 0.0
    %1380 = vmatprep.subr.mxu0 0.0
    %1381 = vmatpush1.xpose.msra.mxu0 0.0
    %1382 = vmatprep.subr.mxu0 0.0
    %1383 = vmatpush1.xpose.msra.mxu0 0.0
    %1384 = vmatprep.subr.mxu0 0.0
    %1385 = vmatpush1.xpose.msra.mxu0 0.0
    %1386 = vmatprep.subr.mxu0 0.0
    %1387 = vmatpush1.xpose.msra.mxu0 0.0
    %1388 = vmatprep.subr.mxu0 0.0
    %1389 = vmatpush1.xpose.msra.mxu0 0.0
    %1390 = vmatprep.subr.mxu0 0.0
    %1391 = vmatpush1.xpose.msra.mxu0 0.0
    %1392 = vmatprep.subr.mxu0 0.0
    %1393 = vmatpush1.xpose.msra.mxu0 0.0
    %1394 = vmatprep.subr.mxu0 0.0
    %1395 = vmatpush1.xpose.msra.mxu0 0.0
    %1396 = vmatprep.subr.mxu0 0.0
    %1397 = vmatpush1.xpose.msra.mxu0 0.0
    %1398 = vmatprep.subr.mxu0 0.0
    %1399 = vmatpush1.xpose.msra.mxu0 0.0
    %1400 = vmatprep.subr.mxu0 0.0
    %1401 = vmatpush1.xpose.msra.mxu0 0.0
    %1402 = vmatprep.subr.mxu0 0.0
    %1403 = vmatpush1.xpose.msra.mxu0 0.0
    %1404 = vmatprep.subr.mxu0 0.0
    %1405 = vmatpush1.xpose.msra.mxu0 0.0
    %1406 = vmatprep.subr.mxu0 0.0
    %1407 = vmatpush1.xpose.msra.mxu0 0.0
    %1408 = vmatprep.subr.mxu0 0.0
    %1409 = vmatpush1.xpose.msra.mxu0 0.0
    %1410 = vmatprep.subr.mxu0 0.0
    %1411 = vmatpush1.xpose.msra.mxu0 0.0
    %1412 = vmatprep.subr.mxu0 0.0
    %1413 = vmatpush1.xpose.msra.mxu0 0.0
    %1414 = vmatprep.subr.mxu0 0.0
    %1415 = vmatpush1.xpose.msra.mxu0 0.0
    %1416 = vmatprep.subr.mxu0 0.0
    %1417 = vmatpush1.xpose.msra.mxu0 0.0
    %1418 = vmatprep.subr.mxu0 0.0
    %1419 = vmatpush1.xpose.msra.mxu0 0.0
    %1420 = vmatprep.mubr.f32.mxu0 0.0
    %1421 = vmatmul.mubr.f32.gmra.mrb[0].mxu0 %v1340
    %v1422 = vpop.f32.mrb[0].mxu0
    %v1423 = vadd.f32 0.0, %v1422
    %v1424 = vpop.f32.mrb[0].mxu0
    %1425 = vmatprep.mubr.f32.mxu0 0.0
    %1426 = vmatmul.mubr.f32.gmra.mrb[0].mxu0 %v1341
    %v1427 = vpop.f32.mrb[0].mxu0
    %v1428 = vadd.f32 0.0, %v1427
    %v1429 = vpop.f32.mrb[0].mxu0
    %1430 = vdwg.mxu0
    %1431 = vxpose.xlu0.b32.start [1/16] %v796, 128
    %1432 = vxpose.xlu0.b32.cont [2/16] %v801, 128
    %1433 = vxpose.xlu0.b32.cont [3/16] %v806, 128
    %1434 = vxpose.xlu0.b32.cont [4/16] %v811, 128
    %1435 = vxpose.xlu0.b32.cont [5/16] %v816, 128
    %1436 = vxpose.xlu0.b32.cont [6/16] %v821, 128
    %1437 = vxpose.xlu0.b32.cont [7/16] %v826, 128
    %1438 = vxpose.xlu0.b32.cont [8/16] %v831, 128
    %1439 = vxpose.xlu0.b32.cont [9/16] %v836, 128
    %1440 = vxpose.xlu0.b32.cont [10/16] %v841, 128
    %1441 = vxpose.xlu0.b32.cont [11/16] %v846, 128
    %1442 = vxpose.xlu0.b32.cont [12/16] %v851, 128
    %1443 = vxpose.xlu0.b32.cont [13/16] %v856, 128
    %1444 = vxpose.xlu0.b32.cont [14/16] %v861, 128
    %1445 = vxpose.xlu0.b32.cont [15/16] %v866, 128
    %1446 = vxpose.xlu0.b32.end [16/16] %v871, 128
    %v1447 = vpop.trf.xlu0
    %v1448 = vpop.trf.xlu0
    %v1449 = vpop.trf.xlu0
    %v1450 = vpop.trf.xlu0
    %v1451 = vpop.trf.xlu0
    %v1452 = vpop.trf.xlu0
    %v1453 = vpop.trf.xlu0
    %v1454 = vpop.trf.xlu0
    %v1455 = vpop.trf.xlu0
    %v1456 = vpop.trf.xlu0
    %v1457 = vpop.trf.xlu0
    %v1458 = vpop.trf.xlu0
    %v1459 = vpop.trf.xlu0
    %v1460 = vpop.trf.xlu0
    %v1461 = vpop.trf.xlu0
    %v1462 = vpop.trf.xlu0
    %1463 = vmatprep.subr.mxu0 0.0
    %1464 = vmatpush1.xpose.msra.mxu0 %v396
    %1465 = vmatprep.subr.mxu0 0.0
    %1466 = vmatpush1.xpose.msra.mxu0 0.0
    %1467 = vmatprep.subr.mxu0 0.0
    %1468 = vmatpush1.xpose.msra.mxu0 0.0
    %1469 = vmatprep.subr.mxu0 0.0
    %1470 = vmatpush1.xpose.msra.mxu0 0.0
    %1471 = vmatprep.subr.mxu0 0.0
    %1472 = vmatpush1.xpose.msra.mxu0 0.0
    %1473 = vmatprep.subr.mxu0 0.0
    %1474 = vmatpush1.xpose.msra.mxu0 0.0
    %1475 = vmatprep.subr.mxu0 0.0
    %1476 = vmatpush1.xpose.msra.mxu0 0.0
    %1477 = vmatprep.subr.mxu0 0.0
    %1478 = vmatpush1.xpose.msra.mxu0 0.0
    %1479 = vmatprep.subr.mxu0 0.0
    %1480 = vmatpush1.xpose.msra.mxu0 0.0
    %1481 = vmatprep.subr.mxu0 0.0
    %1482 = vmatpush1.xpose.msra.mxu0 0.0
    %1483 = vmatprep.subr.mxu0 0.0
    %1484 = vmatpush1.xpose.msra.mxu0 0.0
    %1485 = vmatprep.subr.mxu0 0.0
    %1486 = vmatpush1.xpose.msra.mxu0 0.0
    %1487 = vmatprep.subr.mxu0 0.0
    %1488 = vmatpush1.xpose.msra.mxu0 0.0
    %1489 = vmatprep.subr.mxu0 0.0
    %1490 = vmatpush1.xpose.msra.mxu0 0.0
    %1491 = vmatprep.subr.mxu0 0.0
    %1492 = vmatpush1.xpose.msra.mxu0 0.0
    %1493 = vmatprep.subr.mxu0 0.0
    %1494 = vmatpush1.xpose.msra.mxu0 0.0
    %1495 = vmatprep.subr.mxu0 0.0
    %1496 = vmatpush1.xpose.msra.mxu0 0.0
    %1497 = vmatprep.subr.mxu0 0.0
    %1498 = vmatpush1.xpose.msra.mxu0 0.0
    %1499 = vmatprep.subr.mxu0 0.0
    %1500 = vmatpush1.xpose.msra.mxu0 0.0
    %1501 = vmatprep.subr.mxu0 0.0
    %1502 = vmatpush1.xpose.msra.mxu0 0.0
    %1503 = vmatprep.subr.mxu0 0.0
    %1504 = vmatpush1.xpose.msra.mxu0 0.0
    %1505 = vmatprep.subr.mxu0 0.0
    %1506 = vmatpush1.xpose.msra.mxu0 0.0
    %1507 = vmatprep.subr.mxu0 0.0
    %1508 = vmatpush1.xpose.msra.mxu0 0.0
    %1509 = vmatprep.subr.mxu0 0.0
    %1510 = vmatpush1.xpose.msra.mxu0 0.0
    %1511 = vmatprep.subr.mxu0 0.0
    %1512 = vmatpush1.xpose.msra.mxu0 0.0
    %1513 = vmatprep.subr.mxu0 0.0
    %1514 = vmatpush1.xpose.msra.mxu0 0.0
    %1515 = vmatprep.subr.mxu0 0.0
    %1516 = vmatpush1.xpose.msra.mxu0 0.0
    %1517 = vmatprep.subr.mxu0 0.0
    %1518 = vmatpush1.xpose.msra.mxu0 0.0
    %1519 = vmatprep.subr.mxu0 0.0
    %1520 = vmatpush1.xpose.msra.mxu0 0.0
    %1521 = vmatprep.subr.mxu0 0.0
    %1522 = vmatpush1.xpose.msra.mxu0 0.0
    %1523 = vmatprep.subr.mxu0 0.0
    %1524 = vmatpush1.xpose.msra.mxu0 0.0
    %1525 = vmatprep.subr.mxu0 0.0
    %1526 = vmatpush1.xpose.msra.mxu0 0.0
    %1527 = vmatprep.mubr.f32.mxu0 0.0
    %1528 = vmatmul.mubr.f32.gmra.mrb[0].mxu0 %v1447
    %v1529 = vpop.f32.mrb[0].mxu0
    %v1530 = vadd.f32 0.0, %v1529
    %v1531 = vpop.f32.mrb[0].mxu0
    %1532 = vmatprep.mubr.f32.mxu0 0.0
    %1533 = vmatmul.mubr.f32.gmra.mrb[0].mxu0 %v1448
    %v1534 = vpop.f32.mrb[0].mxu0
    %v1535 = vadd.f32 0.0, %v1534
    %v1536 = vpop.f32.mrb[0].mxu0
    %1537 = vdwg.mxu0
    %1538 = vxpose.xlu0.b32.start [1/16] %v1021, 128
    %1539 = vxpose.xlu0.b32.cont [2/16] %v1026, 128
    %1540 = vxpose.xlu0.b32.cont [3/16] %v1031, 128
    %1541 = vxpose.xlu0.b32.cont [4/16] %v1036, 128
    %1542 = vxpose.xlu0.b32.cont [5/16] %v1041, 128
    %1543 = vxpose.xlu0.b32.cont [6/16] %v1046, 128
    %1544 = vxpose.xlu0.b32.cont [7/16] %v1051, 128
    %1545 = vxpose.xlu0.b32.cont [8/16] %v1056, 128
    %1546 = vxpose.xlu0.b32.cont [9/16] %v1061, 128
    %1547 = vxpose.xlu0.b32.cont [10/16] %v1066, 128
    %1548 = vxpose.xlu0.b32.cont [11/16] %v1071, 128
    %1549 = vxpose.xlu0.b32.cont [12/16] %v1076, 128
    %1550 = vxpose.xlu0.b32.cont [13/16] %v1081, 128
    %1551 = vxpose.xlu0.b32.cont [14/16] %v1086, 128
    %1552 = vxpose.xlu0.b32.cont [15/16] %v1091, 128
    %1553 = vxpose.xlu0.b32.end [16/16] %v1096, 128
    %v1554 = vpop.trf.xlu0
    %v1555 = vpop.trf.xlu0
    %v1556 = vpop.trf.xlu0
    %v1557 = vpop.trf.xlu0
    %v1558 = vpop.trf.xlu0
    %v1559 = vpop.trf.xlu0
    %v1560 = vpop.trf.xlu0
    %v1561 = vpop.trf.xlu0
    %v1562 = vpop.trf.xlu0
    %v1563 = vpop.trf.xlu0
    %v1564 = vpop.trf.xlu0
    %v1565 = vpop.trf.xlu0
    %v1566 = vpop.trf.xlu0
    %v1567 = vpop.trf.xlu0
    %v1568 = vpop.trf.xlu0
    %v1569 = vpop.trf.xlu0
    %1570 = vmatprep.subr.mxu0 0.0
    %1571 = vmatpush1.xpose.msra.mxu0 %v397
    %1572 = vmatprep.subr.mxu0 0.0
    %1573 = vmatpush1.xpose.msra.mxu0 0.0
    %1574 = vmatprep.subr.mxu0 0.0
    %1575 = vmatpush1.xpose.msra.mxu0 0.0
    %1576 = vmatprep.subr.mxu0 0.0
    %1577 = vmatpush1.xpose.msra.mxu0 0.0
    %1578 = vmatprep.subr.mxu0 0.0
    %1579 = vmatpush1.xpose.msra.mxu0 0.0
    %1580 = vmatprep.subr.mxu0 0.0
    %1581 = vmatpush1.xpose.msra.mxu0 0.0
    %1582 = vmatprep.subr.mxu0 0.0
    %1583 = vmatpush1.xpose.msra.mxu0 0.0
    %1584 = vmatprep.subr.mxu0 0.0
    %1585 = vmatpush1.xpose.msra.mxu0 0.0
    %1586 = vmatprep.subr.mxu0 0.0
    %1587 = vmatpush1.xpose.msra.mxu0 0.0
    %1588 = vmatprep.subr.mxu0 0.0
    %1589 = vmatpush1.xpose.msra.mxu0 0.0
    %1590 = vmatprep.subr.mxu0 0.0
    %1591 = vmatpush1.xpose.msra.mxu0 0.0
    %1592 = vmatprep.subr.mxu0 0.0
    %1593 = vmatpush1.xpose.msra.mxu0 0.0
    %1594 = vmatprep.subr.mxu0 0.0
    %1595 = vmatpush1.xpose.msra.mxu0 0.0
    %1596 = vmatprep.subr.mxu0 0.0
    %1597 = vmatpush1.xpose.msra.mxu0 0.0
    %1598 = vmatprep.subr.mxu0 0.0
    %1599 = vmatpush1.xpose.msra.mxu0 0.0
    %1600 = vmatprep.subr.mxu0 0.0
    %1601 = vmatpush1.xpose.msra.mxu0 0.0
    %1602 = vmatprep.subr.mxu0 0.0
    %1603 = vmatpush1.xpose.msra.mxu0 0.0
    %1604 = vmatprep.subr.mxu0 0.0
    %1605 = vmatpush1.xpose.msra.mxu0 0.0
    %1606 = vmatprep.subr.mxu0 0.0
    %1607 = vmatpush1.xpose.msra.mxu0 0.0
    %1608 = vmatprep.subr.mxu0 0.0
    %1609 = vmatpush1.xpose.msra.mxu0 0.0
    %1610 = vmatprep.subr.mxu0 0.0
    %1611 = vmatpush1.xpose.msra.mxu0 0.0
    %1612 = vmatprep.subr.mxu0 0.0
    %1613 = vmatpush1.xpose.msra.mxu0 0.0
    %1614 = vmatprep.subr.mxu0 0.0
    %1615 = vmatpush1.xpose.msra.mxu0 0.0
    %1616 = vmatprep.subr.mxu0 0.0
    %1617 = vmatpush1.xpose.msra.mxu0 0.0
    %1618 = vmatprep.subr.mxu0 0.0
    %1619 = vmatpush1.xpose.msra.mxu0 0.0
    %1620 = vmatprep.subr.mxu0 0.0
    %1621 = vmatpush1.xpose.msra.mxu0 0.0
    %1622 = vmatprep.subr.mxu0 0.0
    %1623 = vmatpush1.xpose.msra.mxu0 0.0
    %1624 = vmatprep.subr.mxu0 0.0
    %1625 = vmatpush1.xpose.msra.mxu0 0.0
    %1626 = vmatprep.subr.mxu0 0.0
    %1627 = vmatpush1.xpose.msra.mxu0 0.0
    %1628 = vmatprep.subr.mxu0 0.0
    %1629 = vmatpush1.xpose.msra.mxu0 0.0
    %1630 = vmatprep.subr.mxu0 0.0
    %1631 = vmatpush1.xpose.msra.mxu0 0.0
    %1632 = vmatprep.subr.mxu0 0.0
    %1633 = vmatpush1.xpose.msra.mxu0 0.0
    %1634 = vmatprep.mubr.f32.mxu0 0.0
    %1635 = vmatmul.mubr.f32.gmra.mrb[0].mxu0 %v1554
    %v1636 = vpop.f32.mrb[0].mxu0
    %v1637 = vadd.f32 0.0, %v1636
    %v1638 = vpop.f32.mrb[0].mxu0
    %1639 = vmatprep.mubr.f32.mxu0 0.0
    %1640 = vmatmul.mubr.f32.gmra.mrb[0].mxu0 %v1555
    %v1641 = vpop.f32.mrb[0].mxu0
    %v1642 = vadd.f32 0.0, %v1641
    %v1643 = vpop.f32.mrb[0].mxu0
    %1644 = vdwg.mxu0
    %1645 = vxpose.xlu0.b32.start [1/16] %v1246, 128
    %1646 = vxpose.xlu0.b32.cont [2/16] %v1251, 128
    %1647 = vxpose.xlu0.b32.cont [3/16] %v1256, 128
    %1648 = vxpose.xlu0.b32.cont [4/16] %v1261, 128
    %1649 = vxpose.xlu0.b32.cont [5/16] %v1266, 128
    %1650 = vxpose.xlu0.b32.cont [6/16] %v1271, 128
    %1651 = vxpose.xlu0.b32.cont [7/16] %v1276, 128
    %1652 = vxpose.xlu0.b32.cont [8/16] %v1281, 128
    %1653 = vxpose.xlu0.b32.cont [9/16] %v1286, 128
    %1654 = vxpose.xlu0.b32.cont [10/16] %v1291, 128
    %1655 = vxpose.xlu0.b32.cont [11/16] %v1296, 128
    %1656 = vxpose.xlu0.b32.cont [12/16] %v1301, 128
    %1657 = vxpose.xlu0.b32.cont [13/16] %v1306, 128
    %1658 = vxpose.xlu0.b32.cont [14/16] %v1311, 128
    %1659 = vxpose.xlu0.b32.cont [15/16] %v1316, 128
    %1660 = vxpose.xlu0.b32.end [16/16] %v1321, 128
    %v1661 = vpop.trf.xlu0
    %v1662 = vpop.trf.xlu0
    %v1663 = vpop.trf.xlu0
    %v1664 = vpop.trf.xlu0
    %v1665 = vpop.trf.xlu0
    %v1666 = vpop.trf.xlu0
    %v1667 = vpop.trf.xlu0
    %v1668 = vpop.trf.xlu0
    %v1669 = vpop.trf.xlu0
    %v1670 = vpop.trf.xlu0
    %v1671 = vpop.trf.xlu0
    %v1672 = vpop.trf.xlu0
    %v1673 = vpop.trf.xlu0
    %v1674 = vpop.trf.xlu0
    %v1675 = vpop.trf.xlu0
    %v1676 = vpop.trf.xlu0
    %1677 = vmatprep.subr.mxu0 0.0
    %1678 = vmatpush1.xpose.msra.mxu0 %v398
    %1679 = vmatprep.subr.mxu0 0.0
    %1680 = vmatpush1.xpose.msra.mxu0 0.0
    %1681 = vmatprep.subr.mxu0 0.0
    %1682 = vmatpush1.xpose.msra.mxu0 0.0
    %1683 = vmatprep.subr.mxu0 0.0
    %1684 = vmatpush1.xpose.msra.mxu0 0.0
    %1685 = vmatprep.subr.mxu0 0.0
    %1686 = vmatpush1.xpose.msra.mxu0 0.0
    %1687 = vmatprep.subr.mxu0 0.0
    %1688 = vmatpush1.xpose.msra.mxu0 0.0
    %1689 = vmatprep.subr.mxu0 0.0
    %1690 = vmatpush1.xpose.msra.mxu0 0.0
    %1691 = vmatprep.subr.mxu0 0.0
    %1692 = vmatpush1.xpose.msra.mxu0 0.0
    %1693 = vmatprep.subr.mxu0 0.0
    %1694 = vmatpush1.xpose.msra.mxu0 0.0
    %1695 = vmatprep.subr.mxu0 0.0
    %1696 = vmatpush1.xpose.msra.mxu0 0.0
    %1697 = vmatprep.subr.mxu0 0.0
    %1698 = vmatpush1.xpose.msra.mxu0 0.0
    %1699 = vmatprep.subr.mxu0 0.0
    %1700 = vmatpush1.xpose.msra.mxu0 0.0
    %1701 = vmatprep.subr.mxu0 0.0
    %1702 = vmatpush1.xpose.msra.mxu0 0.0
    %1703 = vmatprep.subr.mxu0 0.0
    %1704 = vmatpush1.xpose.msra.mxu0 0.0
    %1705 = vmatprep.subr.mxu0 0.0
    %1706 = vmatpush1.xpose.msra.mxu0 0.0
    %1707 = vmatprep.subr.mxu0 0.0
    %1708 = vmatpush1.xpose.msra.mxu0 0.0
    %1709 = vmatprep.subr.mxu0 0.0
    %1710 = vmatpush1.xpose.msra.mxu0 0.0
    %1711 = vmatprep.subr.mxu0 0.0
    %1712 = vmatpush1.xpose.msra.mxu0 0.0
    %1713 = vmatprep.subr.mxu0 0.0
    %1714 = vmatpush1.xpose.msra.mxu0 0.0
    %1715 = vmatprep.subr.mxu0 0.0
    %1716 = vmatpush1.xpose.msra.mxu0 0.0
    %1717 = vmatprep.subr.mxu0 0.0
    %1718 = vmatpush1.xpose.msra.mxu0 0.0
    %1719 = vmatprep.subr.mxu0 0.0
    %1720 = vmatpush1.xpose.msra.mxu0 0.0
    %1721 = vmatprep.subr.mxu0 0.0
    %1722 = vmatpush1.xpose.msra.mxu0 0.0
    %1723 = vmatprep.subr.mxu0 0.0
    %1724 = vmatpush1.xpose.msra.mxu0 0.0
    %1725 = vmatprep.subr.mxu0 0.0
    %1726 = vmatpush1.xpose.msra.mxu0 0.0
    %1727 = vmatprep.subr.mxu0 0.0
    %1728 = vmatpush1.xpose.msra.mxu0 0.0
    %1729 = vmatprep.subr.mxu0 0.0
    %1730 = vmatpush1.xpose.msra.mxu0 0.0
    %1731 = vmatprep.subr.mxu0 0.0
    %1732 = vmatpush1.xpose.msra.mxu0 0.0
    %1733 = vmatprep.subr.mxu0 0.0
    %1734 = vmatpush1.xpose.msra.mxu0 0.0
    %1735 = vmatprep.subr.mxu0 0.0
    %1736 = vmatpush1.xpose.msra.mxu0 0.0
    %1737 = vmatprep.subr.mxu0 0.0
    %1738 = vmatpush1.xpose.msra.mxu0 0.0
    %1739 = vmatprep.subr.mxu0 0.0
    %1740 = vmatpush1.xpose.msra.mxu0 0.0
    %1741 = vmatprep.mubr.f32.mxu0 0.0
    %1742 = vmatmul.mubr.f32.gmra.mrb[0].mxu0 %v1661
    %v1743 = vpop.f32.mrb[0].mxu0
    %v1744 = vadd.f32 0.0, %v1743
    %v1745 = vpop.f32.mrb[0].mxu0
    %1746 = vmatprep.mubr.f32.mxu0 0.0
    %1747 = vmatmul.mubr.f32.gmra.mrb[0].mxu0 %v1662
    %v1748 = vpop.f32.mrb[0].mxu0
    %v1749 = vadd.f32 0.0, %v1748
    %v1750 = vpop.f32.mrb[0].mxu0
    %1751 = vdwg.mxu0
    %v1752 = vrot.slane %v419, 4
    %v1753 = vadd.f32 %v419, %v1752
    %v1754 = vrot.slane %v1753, 2
    %v1755 = vadd.f32 %v1753, %v1754
    %v1756 = vrot.slane %v1755, 1
    %v1757 = vadd.f32 %v1755, %v1756
    %v1758 = vrot.slane %v420, 4
    %v1759 = vadd.f32 %v420, %v1758
    %v1760 = vrot.slane %v1759, 2
    %v1761 = vadd.f32 %v1759, %v1760
    %v1762 = vrot.slane %v1761, 1
    %v1763 = vadd.f32 %v1761, %v1762
    %v1764 = vrot.slane %v421, 4
    %v1765 = vadd.f32 %v421, %v1764
    %v1766 = vrot.slane %v1765, 2
    %v1767 = vadd.f32 %v1765, %v1766
    %v1768 = vrot.slane %v1767, 1
    %v1769 = vadd.f32 %v1767, %v1768
    %v1770 = vrot.slane %v422, 4
    %v1771 = vadd.f32 %v422, %v1770
    %v1772 = vrot.slane %v1771, 2
    %v1773 = vadd.f32 %v1771, %v1772
    %v1774 = vrot.slane %v1773, 1
    %v1775 = vadd.f32 %v1773, %v1774
    %1776 = vmatprep.subr.mxu0 0.0
    %1777 = vmatpush1.xpose.msra.mxu0 %v395
    %1778 = vmatprep.subr.mxu0 0.0
    %1779 = vmatpush1.xpose.msra.mxu0 0.0
    %1780 = vmatprep.subr.mxu0 0.0
    %1781 = vmatpush1.xpose.msra.mxu0 0.0
    %1782 = vmatprep.subr.mxu0 0.0
    %1783 = vmatpush1.xpose.msra.mxu0 0.0
    %1784 = vmatprep.subr.mxu0 0.0
    %1785 = vmatpush1.xpose.msra.mxu0 0.0
    %1786 = vmatprep.subr.mxu0 0.0
    %1787 = vmatpush1.xpose.msra.mxu0 0.0
    %1788 = vmatprep.subr.mxu0 0.0
    %1789 = vmatpush1.xpose.msra.mxu0 0.0
    %1790 = vmatprep.subr.mxu0 0.0
    %1791 = vmatpush1.xpose.msra.mxu0 0.0
    %1792 = vmatprep.subr.mxu0 0.0
    %1793 = vmatpush1.xpose.msra.mxu0 0.0
    %1794 = vmatprep.subr.mxu0 0.0
    %1795 = vmatpush1.xpose.msra.mxu0 0.0
    %1796 = vmatprep.subr.mxu0 0.0
    %1797 = vmatpush1.xpose.msra.mxu0 0.0
    %1798 = vmatprep.subr.mxu0 0.0
    %1799 = vmatpush1.xpose.msra.mxu0 0.0
    %1800 = vmatprep.subr.mxu0 0.0
    %1801 = vmatpush1.xpose.msra.mxu0 0.0
    %1802 = vmatprep.subr.mxu0 0.0
    %1803 = vmatpush1.xpose.msra.mxu0 0.0
    %1804 = vmatprep.subr.mxu0 0.0
    %1805 = vmatpush1.xpose.msra.mxu0 0.0
    %1806 = vmatprep.subr.mxu0 0.0
    %1807 = vmatpush1.xpose.msra.mxu0 0.0
    %1808 = vmatprep.subr.mxu0 0.0
    %1809 = vmatpush1.xpose.msra.mxu0 0.0
    %1810 = vmatprep.subr.mxu0 0.0
    %1811 = vmatpush1.xpose.msra.mxu0 0.0
    %1812 = vmatprep.subr.mxu0 0.0
    %1813 = vmatpush1.xpose.msra.mxu0 0.0
    %1814 = vmatprep.subr.mxu0 0.0
    %1815 = vmatpush1.xpose.msra.mxu0 0.0
    %1816 = vmatprep.subr.mxu0 0.0
    %1817 = vmatpush1.xpose.msra.mxu0 0.0
    %1818 = vmatprep.subr.mxu0 0.0
    %1819 = vmatpush1.xpose.msra.mxu0 0.0
    %1820 = vmatprep.subr.mxu0 0.0
    %1821 = vmatpush1.xpose.msra.mxu0 0.0
    %1822 = vmatprep.subr.mxu0 0.0
    %1823 = vmatpush1.xpose.msra.mxu0 0.0
    %1824 = vmatprep.subr.mxu0 0.0
    %1825 = vmatpush1.xpose.msra.mxu0 0.0
    %1826 = vmatprep.subr.mxu0 0.0
    %1827 = vmatpush1.xpose.msra.mxu0 0.0
    %1828 = vmatprep.subr.mxu0 0.0
    %1829 = vmatpush1.xpose.msra.mxu0 0.0
    %1830 = vmatprep.subr.mxu0 0.0
    %1831 = vmatpush1.xpose.msra.mxu0 0.0
    %1832 = vmatprep.subr.mxu0 0.0
    %1833 = vmatpush1.xpose.msra.mxu0 0.0
    %1834 = vmatprep.subr.mxu0 0.0
    %1835 = vmatpush1.xpose.msra.mxu0 0.0
    %1836 = vmatprep.subr.mxu0 0.0
    %1837 = vmatpush1.xpose.msra.mxu0 0.0
    %1838 = vmatprep.subr.mxu0 0.0
    %1839 = vmatpush1.xpose.msra.mxu0 0.0
    %1840 = vmatprep.mubr.f32.mxu0 0.0
    %1841 = vmatmul.mubr.f32.gmra.mrb[0].mxu0 %v1757
    %v1842 = vpop.f32.mrb[0].mxu0
    %v1843 = vadd.f32 0.0, %v1842
    %v1844 = vpop.f32.mrb[0].mxu0
    %1845 = vdwg.mxu0
    %1846 = vmatprep.subr.mxu0 0.0
    %1847 = vmatpush1.xpose.msra.mxu0 %v396
    %1848 = vmatprep.subr.mxu0 0.0
    %1849 = vmatpush1.xpose.msra.mxu0 0.0
    %1850 = vmatprep.subr.mxu0 0.0
    %1851 = vmatpush1.xpose.msra.mxu0 0.0
    %1852 = vmatprep.subr.mxu0 0.0
    %1853 = vmatpush1.xpose.msra.mxu0 0.0
    %1854 = vmatprep.subr.mxu0 0.0
    %1855 = vmatpush1.xpose.msra.mxu0 0.0
    %1856 = vmatprep.subr.mxu0 0.0
    %1857 = vmatpush1.xpose.msra.mxu0 0.0
    %1858 = vmatprep.subr.mxu0 0.0
    %1859 = vmatpush1.xpose.msra.mxu0 0.0
    %1860 = vmatprep.subr.mxu0 0.0
    %1861 = vmatpush1.xpose.msra.mxu0 0.0
    %1862 = vmatprep.subr.mxu0 0.0
    %1863 = vmatpush1.xpose.msra.mxu0 0.0
    %1864 = vmatprep.subr.mxu0 0.0
    %1865 = vmatpush1.xpose.msra.mxu0 0.0
    %1866 = vmatprep.subr.mxu0 0.0
    %1867 = vmatpush1.xpose.msra.mxu0 0.0
    %1868 = vmatprep.subr.mxu0 0.0
    %1869 = vmatpush1.xpose.msra.mxu0 0.0
    %1870 = vmatprep.subr.mxu0 0.0
    %1871 = vmatpush1.xpose.msra.mxu0 0.0
    %1872 = vmatprep.subr.mxu0 0.0
    %1873 = vmatpush1.xpose.msra.mxu0 0.0
    %1874 = vmatprep.subr.mxu0 0.0
    %1875 = vmatpush1.xpose.msra.mxu0 0.0
    %1876 = vmatprep.subr.mxu0 0.0
    %1877 = vmatpush1.xpose.msra.mxu0 0.0
    %1878 = vmatprep.subr.mxu0 0.0
    %1879 = vmatpush1.xpose.msra.mxu0 0.0
    %1880 = vmatprep.subr.mxu0 0.0
    %1881 = vmatpush1.xpose.msra.mxu0 0.0
    %1882 = vmatprep.subr.mxu0 0.0
    %1883 = vmatpush1.xpose.msra.mxu0 0.0
    %1884 = vmatprep.subr.mxu0 0.0
    %1885 = vmatpush1.xpose.msra.mxu0 0.0
    %1886 = vmatprep.subr.mxu0 0.0
    %1887 = vmatpush1.xpose.msra.mxu0 0.0
    %1888 = vmatprep.subr.mxu0 0.0
    %1889 = vmatpush1.xpose.msra.mxu0 0.0
    %1890 = vmatprep.subr.mxu0 0.0
    %1891 = vmatpush1.xpose.msra.mxu0 0.0
    %1892 = vmatprep.subr.mxu0 0.0
    %1893 = vmatpush1.xpose.msra.mxu0 0.0
    %1894 = vmatprep.subr.mxu0 0.0
    %1895 = vmatpush1.xpose.msra.mxu0 0.0
    %1896 = vmatprep.subr.mxu0 0.0
    %1897 = vmatpush1.xpose.msra.mxu0 0.0
    %1898 = vmatprep.subr.mxu0 0.0
    %1899 = vmatpush1.xpose.msra.mxu0 0.0
    %1900 = vmatprep.subr.mxu0 0.0
    %1901 = vmatpush1.xpose.msra.mxu0 0.0
    %1902 = vmatprep.subr.mxu0 0.0
    %1903 = vmatpush1.xpose.msra.mxu0 0.0
    %1904 = vmatprep.subr.mxu0 0.0
    %1905 = vmatpush1.xpose.msra.mxu0 0.0
    %1906 = vmatprep.subr.mxu0 0.0
    %1907 = vmatpush1.xpose.msra.mxu0 0.0
    %1908 = vmatprep.subr.mxu0 0.0
    %1909 = vmatpush1.xpose.msra.mxu0 0.0
    %1910 = vmatprep.mubr.f32.mxu0 0.0
    %1911 = vmatmul.mubr.f32.gmra.mrb[0].mxu0 %v1763
    %v1912 = vpop.f32.mrb[0].mxu0
    %v1913 = vadd.f32 0.0, %v1912
    %v1914 = vpop.f32.mrb[0].mxu0
    %1915 = vdwg.mxu0
    %1916 = vmatprep.subr.mxu0 0.0
    %1917 = vmatpush1.xpose.msra.mxu0 %v397
    %1918 = vmatprep.subr.mxu0 0.0
    %1919 = vmatpush1.xpose.msra.mxu0 0.0
    %1920 = vmatprep.subr.mxu0 0.0
    %1921 = vmatpush1.xpose.msra.mxu0 0.0
    %1922 = vmatprep.subr.mxu0 0.0
    %1923 = vmatpush1.xpose.msra.mxu0 0.0
    %1924 = vmatprep.subr.mxu0 0.0
    %1925 = vmatpush1.xpose.msra.mxu0 0.0
    %1926 = vmatprep.subr.mxu0 0.0
    %1927 = vmatpush1.xpose.msra.mxu0 0.0
    %1928 = vmatprep.subr.mxu0 0.0
    %1929 = vmatpush1.xpose.msra.mxu0 0.0
    %1930 = vmatprep.subr.mxu0 0.0
    %1931 = vmatpush1.xpose.msra.mxu0 0.0
    %1932 = vmatprep.subr.mxu0 0.0
    %1933 = vmatpush1.xpose.msra.mxu0 0.0
    %1934 = vmatprep.subr.mxu0 0.0
    %1935 = vmatpush1.xpose.msra.mxu0 0.0
    %1936 = vmatprep.subr.mxu0 0.0
    %1937 = vmatpush1.xpose.msra.mxu0 0.0
    %1938 = vmatprep.subr.mxu0 0.0
    %1939 = vmatpush1.xpose.msra.mxu0 0.0
    %1940 = vmatprep.subr.mxu0 0.0
    %1941 = vmatpush1.xpose.msra.mxu0 0.0
    %1942 = vmatprep.subr.mxu0 0.0
    %1943 = vmatpush1.xpose.msra.mxu0 0.0
    %1944 = vmatprep.subr.mxu0 0.0
    %1945 = vmatpush1.xpose.msra.mxu0 0.0
    %1946 = vmatprep.subr.mxu0 0.0
    %1947 = vmatpush1.xpose.msra.mxu0 0.0
    %1948 = vmatprep.subr.mxu0 0.0
    %1949 = vmatpush1.xpose.msra.mxu0 0.0
    %1950 = vmatprep.subr.mxu0 0.0
    %1951 = vmatpush1.xpose.msra.mxu0 0.0
    %1952 = vmatprep.subr.mxu0 0.0
    %1953 = vmatpush1.xpose.msra.mxu0 0.0
    %1954 = vmatprep.subr.mxu0 0.0
    %1955 = vmatpush1.xpose.msra.mxu0 0.0
    %1956 = vmatprep.subr.mxu0 0.0
    %1957 = vmatpush1.xpose.msra.mxu0 0.0
    %1958 = vmatprep.subr.mxu0 0.0
    %1959 = vmatpush1.xpose.msra.mxu0 0.0
    %1960 = vmatprep.subr.mxu0 0.0
    %1961 = vmatpush1.xpose.msra.mxu0 0.0
    %1962 = vmatprep.subr.mxu0 0.0
    %1963 = vmatpush1.xpose.msra.mxu0 0.0
    %1964 = vmatprep.subr.mxu0 0.0
    %1965 = vmatpush1.xpose.msra.mxu0 0.0
    %1966 = vmatprep.subr.mxu0 0.0
    %1967 = vmatpush1.xpose.msra.mxu0 0.0
    %1968 = vmatprep.subr.mxu0 0.0
    %1969 = vmatpush1.xpose.msra.mxu0 0.0
    %1970 = vmatprep.subr.mxu0 0.0
    %1971 = vmatpush1.xpose.msra.mxu0 0.0
    %1972 = vmatprep.subr.mxu0 0.0
    %1973 = vmatpush1.xpose.msra.mxu0 0.0
    %1974 = vmatprep.subr.mxu0 0.0
    %1975 = vmatpush1.xpose.msra.mxu0 0.0
    %1976 = vmatprep.subr.mxu0 0.0
    %1977 = vmatpush1.xpose.msra.mxu0 0.0
    %1978 = vmatprep.subr.mxu0 0.0
    %1979 = vmatpush1.xpose.msra.mxu0 0.0
    %1980 = vmatprep.mubr.f32.mxu0 0.0
    %1981 = vmatmul.mubr.f32.gmra.mrb[0].mxu0 %v1769
    %v1982 = vpop.f32.mrb[0].mxu0
    %v1983 = vadd.f32 0.0, %v1982
    %v1984 = vpop.f32.mrb[0].mxu0
    %1985 = vdwg.mxu0
    %1986 = vmatprep.subr.mxu0 0.0
    %1987 = vmatpush1.xpose.msra.mxu0 %v398
    %1988 = vmatprep.subr.mxu0 0.0
    %1989 = vmatpush1.xpose.msra.mxu0 0.0
    %1990 = vmatprep.subr.mxu0 0.0
    %1991 = vmatpush1.xpose.msra.mxu0 0.0
    %1992 = vmatprep.subr.mxu0 0.0
    %1993 = vmatpush1.xpose.msra.mxu0 0.0
    %1994 = vmatprep.subr.mxu0 0.0
    %1995 = vmatpush1.xpose.msra.mxu0 0.0
    %1996 = vmatprep.subr.mxu0 0.0
    %1997 = vmatpush1.xpose.msra.mxu0 0.0
    %1998 = vmatprep.subr.mxu0 0.0
    %1999 = vmatpush1.xpose.msra.mxu0 0.0
    %2000 = vmatprep.subr.mxu0 0.0
    %2001 = vmatpush1.xpose.msra.mxu0 0.0
    %2002 = vmatprep.subr.mxu0 0.0
    %2003 = vmatpush1.xpose.msra.mxu0 0.0
    %2004 = vmatprep.subr.mxu0 0.0
    %2005 = vmatpush1.xpose.msra.mxu0 0.0
    %2006 = vmatprep.subr.mxu0 0.0
    %2007 = vmatpush1.xpose.msra.mxu0 0.0
    %2008 = vmatprep.subr.mxu0 0.0
    %2009 = vmatpush1.xpose.msra.mxu0 0.0
    %2010 = vmatprep.subr.mxu0 0.0
    %2011 = vmatpush1.xpose.msra.mxu0 0.0
    %2012 = vmatprep.subr.mxu0 0.0
    %2013 = vmatpush1.xpose.msra.mxu0 0.0
    %2014 = vmatprep.subr.mxu0 0.0
    %2015 = vmatpush1.xpose.msra.mxu0 0.0
    %2016 = vmatprep.subr.mxu0 0.0
    %2017 = vmatpush1.xpose.msra.mxu0 0.0
    %2018 = vmatprep.subr.mxu0 0.0
    %2019 = vmatpush1.xpose.msra.mxu0 0.0
    %2020 = vmatprep.subr.mxu0 0.0
    %2021 = vmatpush1.xpose.msra.mxu0 0.0
    %2022 = vmatprep.subr.mxu0 0.0
    %2023 = vmatpush1.xpose.msra.mxu0 0.0
    %2024 = vmatprep.subr.mxu0 0.0
    %2025 = vmatpush1.xpose.msra.mxu0 0.0
    %2026 = vmatprep.subr.mxu0 0.0
    %2027 = vmatpush1.xpose.msra.mxu0 0.0
    %2028 = vmatprep.subr.mxu0 0.0
    %2029 = vmatpush1.xpose.msra.mxu0 0.0
    %2030 = vmatprep.subr.mxu0 0.0
    %2031 = vmatpush1.xpose.msra.mxu0 0.0
    %2032 = vmatprep.subr.mxu0 0.0
    %2033 = vmatpush1.xpose.msra.mxu0 0.0
    %2034 = vmatprep.subr.mxu0 0.0
    %2035 = vmatpush1.xpose.msra.mxu0 0.0
    %2036 = vmatprep.subr.mxu0 0.0
    %2037 = vmatpush1.xpose.msra.mxu0 0.0
    %2038 = vmatprep.subr.mxu0 0.0
    %2039 = vmatpush1.xpose.msra.mxu0 0.0
    %2040 = vmatprep.subr.mxu0 0.0
    %2041 = vmatpush1.xpose.msra.mxu0 0.0
    %2042 = vmatprep.subr.mxu0 0.0
    %2043 = vmatpush1.xpose.msra.mxu0 0.0
    %2044 = vmatprep.subr.mxu0 0.0
    %2045 = vmatpush1.xpose.msra.mxu0 0.0
    %2046 = vmatprep.subr.mxu0 0.0
    %2047 = vmatpush1.xpose.msra.mxu0 0.0
    %2048 = vmatprep.subr.mxu0 0.0
    %2049 = vmatpush1.xpose.msra.mxu0 0.0
    %2050 = vmatprep.mubr.f32.mxu0 0.0
    %2051 = vmatmul.mubr.f32.gmra.mrb[0].mxu0 %v1775
    %v2052 = vpop.f32.mrb[0].mxu0
    %v2053 = vadd.f32 0.0, %v2052
    %v2054 = vpop.f32.mrb[0].mxu0
    %2055 = vdwg.mxu0
    %v2056 = vrcp.pop %v1843
    %v2057 = vrcp.pop %v1913
    %v2058 = vrcp.pop %v1983
    %v2059 = vrcp.pop %v2053
    %v2060 = vlaneseq
    %v2061 = vshrl.u32 %v2060, 7
    %v2062 = vsub.s32 0, %v2061
    %v2063 = vrot.slane %v2056, %v2062
    %v2064 = vlaneseq
    %v2065 = vshrl.u32 %v2064, 7
    %v2066 = vsub.s32 0, %v2065
    %v2067 = vrot.slane %v2057, %v2066
    %v2068 = vlaneseq
    %v2069 = vshrl.u32 %v2068, 7
    %v2070 = vsub.s32 0, %v2069
    %v2071 = vrot.slane %v2058, %v2070
    %v2072 = vlaneseq
    %v2073 = vshrl.u32 %v2072, 7
    %v2074 = vsub.s32 0, %v2073
    %v2075 = vrot.slane %v2059, %v2074
    %v2076 = vmul.f32 %v1423, %v2063
    %v2077 = vmul.f32 %v1428, %v2063
    %v2078 = vmul.f32 %v1530, %v2067
    %v2079 = vmul.f32 %v1535, %v2067
    %v2080 = vmul.f32 %v1637, %v2071
    %v2081 = vmul.f32 %v1642, %v2071
    %v2082 = vmul.f32 %v1744, %v2075
    %v2083 = vmul.f32 %v1749, %v2075
    %2084 = vst.msk [vmem:[%s4] sm:$0xff] %vm455, %v2076
    %2085 = vst.msk [vmem:[%s4 + $0x8] sm:$0xff] %vm455, %v2077
    %2086 = vst.msk [vmem:[%s4 + $0x10] sm:$0xff] %vm455, %v2078
    %2087 = vst.msk [vmem:[%s4 + $0x18] sm:$0xff] %vm455, %v2079
    %2088 = vst.msk [vmem:[%s4 + $0x20] sm:$0xff] %vm455, %v2080
    %2089 = vst.msk [vmem:[%s4 + $0x28] sm:$0xff] %vm455, %v2081
    %2090 = vst.msk [vmem:[%s4 + $0x30] sm:$0xff] %vm455, %v2082
    %2091 = vst.msk [vmem:[%s4 + $0x38] sm:$0xff] %vm455, %v2083
    // Predicated region
    $region34: #{tpu_custom_call.1} parent=1 // pred_check
      _
    $region35: #{tpu_custom_call.1} parent=1 // pred_check_branch
      %2093 = sbr.rel (0) target = $region37
    $region36: #{tpu_custom_call.1} parent=1 // pred_region
      _
    $region37: #{tpu_custom_call.1} parent=1 // pred_fallthru
      _
    // Predicated region
    $region38: #{tpu_custom_call.1} parent=1 // pred_check
      _
    $region39: #{tpu_custom_call.1} parent=1 // pred_check_branch
      %2095 = sbr.rel (0) target = $region41
    $region40: #{tpu_custom_call.1} parent=1 // pred_region
      _
    $region41: #{tpu_custom_call.1} parent=1 // pred_fallthru
      _
    %2096 = vsyncpa [#allocation3], 1
    %2097 = vsyncpa [#allocation5], 1
    %2098 = vsyncpa [#allocation8], 1

</llo_original>
